<compile_context>
chip_gen: v6e
topology: v6e:2x2x1
jax: 0.10.0
libtpu: 0.0.40
codegen_flags: <defaults>
</compile_context>

<pallas_src>
import math

import jax
import jax.numpy as jnp
from jax.experimental import pallas as pl
from jax.experimental.pallas import tpu as pltpu


def _relation_attention_kernel(q_ref, k_ref, v_ref, r_ref, mask_ref, o_ref,
                               m_sc, l_sc, acc_sc):
    """One grid step: one (batch, i-tile, j-tile); all H heads share the relation tile.

    Block shapes:
      q_ref    : (1, H, Ti, D)
      k_ref    : (1, H, Tj, D)
      v_ref    : (1, H, Tj, D)
      r_ref    : (1, Ti, Tj, D)   <- shared across heads (loaded once per grid step)
      mask_ref : (1, H, Ti, Tj)
      o_ref    : (1, H, Ti, D)
      scratch  : m_sc (H, Ti, 1), l_sc (H, Ti, 1), acc_sc (H, Ti, D)  all f32
    """
    j = pl.program_id(2)
    nj = pl.num_programs(2)

    num_heads = q_ref.shape[1]
    d = q_ref.shape[-1]
    inv_sqrt_d = 1.0 / math.sqrt(d)

    @pl.when(j == 0)
    def _init():
        m_sc[...] = jnp.full(m_sc.shape, -jnp.inf, dtype=jnp.float32)
        l_sc[...] = jnp.zeros(l_sc.shape, dtype=jnp.float32)
        acc_sc[...] = jnp.zeros(acc_sc.shape, dtype=jnp.float32)

    # Relation tile: read once, reused by every head below (HBM fetched once).
    rel = r_ref[0]                                    # (Ti, Tj, D)

    for h in range(num_heads):                        # static unroll; H is small
        q = q_ref[0, h].astype(jnp.float32)           # (Ti, D)
        k = k_ref[0, h]                               # (Tj, D)
        v = v_ref[0, h]                               # (Tj, D)
        msk = mask_ref[0, h].astype(jnp.float32)      # (Ti, Tj)

        # scores[i,j] = (q[i].k[j]) / sqrt(D)                          -> MXU
        s = jnp.dot(q, k.T, preferred_element_type=jnp.float32) * inv_sqrt_d
        # relative_scores[i,j] = q[i] . rel[i,j]                       -> VPU + lane reduce
        s = s + jnp.sum(q[:, None, :] * rel, axis=-1)
        s = s + msk

        # Online (flash) softmax update over the j axis.
        m_prev = m_sc[h]                                              # (Ti, 1)
        m_new = jnp.maximum(m_prev, jnp.max(s, axis=-1, keepdims=True))
        # NOTE: fully -inf-masked rows produce NaN, matching the reference 0/0 behavior.
        alpha = jnp.exp(m_prev - m_new)                               # (Ti, 1)
        p = jnp.exp(s - m_new)                                        # (Ti, Tj) f32

        l_sc[h] = alpha * l_sc[h] + jnp.sum(p, axis=-1, keepdims=True)

        # self part: attn @ v                                         -> MXU
        pv = jnp.dot(p, v.astype(jnp.float32), preferred_element_type=jnp.float32)
        # relation part: sum_j attn[i,j] * rel[i,j,:]                  -> VPU + sublane reduce
        pr = jnp.sum(p[:, :, None] * rel, axis=1)

        acc_sc[h] = alpha * acc_sc[h] + pv + pr
        m_sc[h] = m_new

    @pl.when(j == nj - 1)
    def _finalize():
        inv_l = pl.reciprocal(l_sc[...], approx=True)                 # EUP slot, once
        o_ref[0] = (acc_sc[...] * inv_l).astype(o_ref.dtype)


def scaled_dot_product_relation_attention(query, key, value, relation, mask,
                                          head_num, *, block_i=128, block_j=128,
                                          vmem_limit_bytes=None):
    """Pallas TPU forward for ScaledDotProductRelationAttention.

    query/key/value: (B*H, N, D); relation: (B, N, N, D); mask: (B, H, N, N).
    Returns (B*H, N, D).
    """
    BH, N, D = query.shape
    H = head_num
    B = BH // H
    assert B * H == BH, "leading dim must be batch_size * head_num"
    assert relation.shape == (B, N, N, D)
    assert mask.shape == (B, H, N, N)

    ti = min(block_i, N)
    tj = min(block_j, N)
    if N % ti or N % tj:
        raise ValueError("node count N must be divisible by the chosen tile sizes")
    if ti != N and ti % 8:
        raise ValueError("i-tile must be a multiple of 8 (sublanes) unless it spans N")
    if tj != N and tj % 128:
        raise ValueError("j-tile must be a multiple of 128 (lanes of the mask) unless it spans N")

    # Fold (B*H) -> (B, H) so one grid step can serve every head from one relation tile.
    q4 = query.reshape(B, H, N, D)
    k4 = key.reshape(B, H, N, D)
    v4 = value.reshape(B, H, N, D)

    grid = (B, N // ti, N // tj)

    grid_spec = pltpu.PrefetchScalarGridSpec(
        num_scalar_prefetch=0,
        grid=grid,
        in_specs=[
            pl.BlockSpec((1, H, ti, D), lambda b, i, j: (b, 0, i, 0)),   # query
            pl.BlockSpec((1, H, tj, D), lambda b, i, j: (b, 0, j, 0)),   # key
            pl.BlockSpec((1, H, tj, D), lambda b, i, j: (b, 0, j, 0)),   # value
            pl.BlockSpec((1, ti, tj, D), lambda b, i, j: (b, i, j, 0)),  # relation (shared by all heads)
            pl.BlockSpec((1, H, ti, tj), lambda b, i, j: (b, 0, i, j)),  # mask
        ],
        out_specs=pl.BlockSpec((1, H, ti, D), lambda b, i, j: (b, 0, i, 0)),
        scratch_shapes=[
            pltpu.VMEM((H, ti, 1), jnp.float32),   # running max m
            pltpu.VMEM((H, ti, 1), jnp.float32),   # running sum l
            pltpu.VMEM((H, ti, D), jnp.float32),   # output accumulator
        ],
    )

    cp_kwargs = dict(dimension_semantics=("parallel", "parallel", "arbitrary"))
    if vmem_limit_bytes is not None:
        # Only needed when choosing tiles larger than the default scoped VMEM allows
        # (e.g. 256x256 relation tiles on v5e/v6e). Default 128x128 tiles fit everywhere.
        cp_kwargs["vmem_limit_bytes"] = vmem_limit_bytes

    out = pl.pallas_call(
        _relation_attention_kernel,
        out_shape=jax.ShapeDtypeStruct((B, H, N, D), query.dtype),
        grid_spec=grid_spec,
        compiler_params=pltpu.CompilerParams(**cp_kwargs),
    )(q4, k4, v4, relation, mask)

    return out.reshape(BH, N, D)


def _reference(query, key, value, relation, mask, head_num):
    """Pure-JAX reference implementing the intended module semantics."""
    BH, N, D = query.shape
    B = BH // head_num
    rel = jnp.broadcast_to(relation[:, None], (B, head_num, N, N, D)).reshape(BH, N, N, D)
    scores = jnp.einsum("bid,bjd->bij", query, key) / math.sqrt(D)
    scores = scores + jnp.einsum("bid,bijd->bij", query, rel)
    scores = scores.reshape(B, head_num, N, N) + mask
    scores = scores.reshape(BH, N, N)
    attn = jax.nn.softmax(scores, axis=-1)
    self_val = jnp.einsum("bij,bjd->bid", attn, value)
    rel_val = jnp.einsum("bij,bijd->bid", attn, rel)
    return self_val + rel_val


if __name__ == "__main__":
    def _run_case(B, H, N, D, block_i, block_j):
        kq, kk, kv, kr, km = jax.random.split(jax.random.PRNGKey(0), 5)
        query = jax.random.normal(kq, (B * H, N, D), dtype=jnp.float32)
        key_t = jax.random.normal(kk, (B * H, N, D), dtype=jnp.float32)
        value = jax.random.normal(kv, (B * H, N, D), dtype=jnp.float32)
        relation = jax.random.normal(kr, (B, N, N, D), dtype=jnp.float32) * 0.1
        mask = jax.random.normal(km, (B, H, N, N), dtype=jnp.float32) * 0.1

        out = scaled_dot_product_relation_attention(
            query, key_t, value, relation, mask, H,
            block_i=block_i, block_j=block_j)
        out = jax.block_until_ready(out)

        ref = _reference(query, key_t, value, relation, mask, H)
        assert out.shape == (B * H, N, D)
        assert jnp.allclose(out, ref, rtol=2e-3, atol=2e-3), \
            f"mismatch vs pure-JAX reference (B={B}, H={H}, N={N}, D={D})"

    # Small case from the module spec (single tile per node axis).
    _run_case(B=2, H=2, N=8, D=32, block_i=128, block_j=128)
    # Case that exercises the tiled online-softmax path: grid = (2, 2, 2).
    _run_case(B=2, H=2, N=256, D=32, block_i=128, block_j=128)

    print("KERNEL_OK")
</pallas_src>

<mosaic_0001>
module attributes {stable_mosaic.version = 11 : i64} {
  func.func @_relation_attention_kernel(%arg0: i32, %arg1: i32, %arg2: i32, %arg3: memref<1x2x8x32xf32, #tpu.memory_space<vmem>>, %arg4: memref<1x2x8x32xf32, #tpu.memory_space<vmem>>, %arg5: memref<1x2x8x32xf32, #tpu.memory_space<vmem>>, %arg6: memref<1x8x8x32xf32, #tpu.memory_space<vmem>>, %arg7: memref<1x2x8x8xf32, #tpu.memory_space<vmem>>, %arg8: memref<1x2x8x32xf32, #tpu.memory_space<vmem>>, %arg9: memref<2x8x1xf32, #tpu.memory_space<vmem>>, %arg10: memref<2x8x1xf32, #tpu.memory_space<vmem>>, %arg11: memref<2x8x32xf32, #tpu.memory_space<vmem>>) attributes {dimension_semantics = [#tpu.dimension_semantics<parallel>, #tpu.dimension_semantics<parallel>, #tpu.dimension_semantics<arbitrary>], iteration_bounds = array<i64: 2, 1, 1>, scalar_prefetch = 0 : i64, scratch_operands = 3 : i64, tpu.core_type = #tpu.core_type<tc>, window_params = [{transform_indices = @transform_0, window_bounds = array<i64: 1, 2, 8, 32>}, {transform_indices = @transform_1, window_bounds = array<i64: 1, 2, 8, 32>}, {transform_indices = @transform_2, window_bounds = array<i64: 1, 2, 8, 32>}, {transform_indices = @transform_3, window_bounds = array<i64: 1, 8, 8, 32>}, {transform_indices = @transform_4, window_bounds = array<i64: 1, 2, 8, 8>}, {transform_indices = @transform_5, window_bounds = array<i64: 1, 2, 8, 32>}]} {
    %c0_i32 = arith.constant 0 : i32
    %0 = arith.cmpi eq, %arg2, %c0_i32 : i32
    %1 = arith.extui %0 : i1 to i32
    %c0_i32_0 = arith.constant 0 : i32
    %2 = arith.cmpi ne, %1, %c0_i32_0 : i32
    scf.if %2 {
      %cst_86 = arith.constant 0xFF800000 : f32
      %116 = vector.broadcast %cst_86 : f32 to vector<2x8x1xf32>
      %c0_87 = arith.constant 0 : index
      %c0_88 = arith.constant 0 : index
      %c0_89 = arith.constant 0 : index
      %117 = vector.load %arg9[%c0_87, %c0_88, %c0_89] : memref<2x8x1xf32, #tpu.memory_space<vmem>>, vector<2x8x1xf32>
      tpu.vector_store %arg9[%c0_87, %c0_88, %c0_89], %116 {strides = array<i32>} : memref<2x8x1xf32, #tpu.memory_space<vmem>>, vector<2x8x1xf32>,
      %cst_90 = arith.constant 0.000000e+00 : f32
      %118 = vector.broadcast %cst_90 : f32 to vector<2x8x1xf32>
      %c0_91 = arith.constant 0 : index
      %c0_92 = arith.constant 0 : index
      %c0_93 = arith.constant 0 : index
      %119 = vector.load %arg10[%c0_91, %c0_92, %c0_93] : memref<2x8x1xf32, #tpu.memory_space<vmem>>, vector<2x8x1xf32>
      tpu.vector_store %arg10[%c0_91, %c0_92, %c0_93], %118 {strides = array<i32>} : memref<2x8x1xf32, #tpu.memory_space<vmem>>, vector<2x8x1xf32>,
      %cst_94 = arith.constant 0.000000e+00 : f32
      %120 = vector.broadcast %cst_94 : f32 to vector<2x8x32xf32>
      %c0_95 = arith.constant 0 : index
      %c0_96 = arith.constant 0 : index
      %c0_97 = arith.constant 0 : index
      %121 = vector.load %arg11[%c0_95, %c0_96, %c0_97] : memref<2x8x32xf32, #tpu.memory_space<vmem>>, vector<2x8x32xf32>
      tpu.vector_store %arg11[%c0_95, %c0_96, %c0_97], %120 {strides = array<i32>} : memref<2x8x32xf32, #tpu.memory_space<vmem>>, vector<2x8x32xf32>,
    } else {
    }
    %c0 = arith.constant 0 : index
    %c0_1 = arith.constant 0 : index
    %c0_2 = arith.constant 0 : index
    %c0_3 = arith.constant 0 : index
    %3 = vector.load %arg6[%c0, %c0_1, %c0_2, %c0_3] : memref<1x8x8x32xf32, #tpu.memory_space<vmem>>, vector<1x8x8x32xf32>
    %4 = vector.shape_cast %3 : vector<1x8x8x32xf32> to vector<8x8x32xf32>
    %c0_4 = arith.constant 0 : index
    %c0_5 = arith.constant 0 : index
    %c0_6 = arith.constant 0 : index
    %c0_7 = arith.constant 0 : index
    %5 = vector.load %arg3[%c0_4, %c0_5, %c0_6, %c0_7] : memref<1x2x8x32xf32, #tpu.memory_space<vmem>>, vector<1x1x8x32xf32>
    %6 = vector.shape_cast %5 : vector<1x1x8x32xf32> to vector<8x32xf32>
    %c0_8 = arith.constant 0 : index
    %c0_9 = arith.constant 0 : index
    %c0_10 = arith.constant 0 : index
    %c0_11 = arith.constant 0 : index
    %7 = vector.load %arg4[%c0_8, %c0_9, %c0_10, %c0_11] : memref<1x2x8x32xf32, #tpu.memory_space<vmem>>, vector<1x1x8x32xf32>
    %8 = vector.shape_cast %7 : vector<1x1x8x32xf32> to vector<8x32xf32>
    %c0_12 = arith.constant 0 : index
    %c0_13 = arith.constant 0 : index
    %c0_14 = arith.constant 0 : index
    %c0_15 = arith.constant 0 : index
    %9 = vector.load %arg5[%c0_12, %c0_13, %c0_14, %c0_15] : memref<1x2x8x32xf32, #tpu.memory_space<vmem>>, vector<1x1x8x32xf32>
    %10 = vector.shape_cast %9 : vector<1x1x8x32xf32> to vector<8x32xf32>
    %c0_16 = arith.constant 0 : index
    %c0_17 = arith.constant 0 : index
    %c0_18 = arith.constant 0 : index
    %c0_19 = arith.constant 0 : index
    %11 = vector.load %arg7[%c0_16, %c0_17, %c0_18, %c0_19] : memref<1x2x8x8xf32, #tpu.memory_space<vmem>>, vector<1x1x8x8xf32>
    %12 = vector.shape_cast %11 : vector<1x1x8x8xf32> to vector<8x8xf32>
    %13 = tpu.transpose %8, [1, 0] : vector<8x32xf32> -> vector<32x8xf32>
    %cst = arith.constant dense<0.000000e+00> : vector<8x8xf32>
    %14 = tpu.matmul %6, %13, %cst {dimension_numbers = #tpu.dot_dimension_numbers<[1], [0], [0], [1], [0, 0, 1, 1], [], []>} : vector<8x32xf32>, vector<32x8xf32>, vector<8x8xf32> -> vector<8x8xf32>
    %cst_20 = arith.constant 0.176776692 : f32
    %15 = vector.broadcast %cst_20 : f32 to vector<8x8xf32>
    %16 = arith.mulf %14, %15 : vector<8x8xf32>
    %17 = vector.shape_cast %6 : vector<8x32xf32> to vector<8x1x32xf32>
    %18 = vector.broadcast %17 : vector<8x1x32xf32> to vector<8x8x32xf32>
    %19 = arith.mulf %18, %4 : vector<8x8x32xf32>
    %cst_21 = arith.constant dense<0.000000e+00> : vector<8x8xf32>
    %20 = vector.multi_reduction <add>, %19, %cst_21 [2] : vector<8x8x32xf32> to vector<8x8xf32>
    %21 = arith.addf %16, %20 : vector<8x8xf32>
    %22 = arith.addf %21, %12 : vector<8x8xf32>
    %c0_22 = arith.constant 0 : index
    %c0_23 = arith.constant 0 : index
    %c0_24 = arith.constant 0 : index
    %23 = vector.load %arg9[%c0_22, %c0_23, %c0_24] : memref<2x8x1xf32, #tpu.memory_space<vmem>>, vector<1x8x1xf32>
    %24 = vector.shape_cast %23 : vector<1x8x1xf32> to vector<8x1xf32>
    %cst_25 = arith.constant dense<0xFF800000> : vector<8xf32>
    %25 = vector.multi_reduction <maximumf>, %22, %cst_25 [1] : vector<8x8xf32> to vector<8xf32>
    %26 = vector.shape_cast %25 : vector<8xf32> to vector<8x1xf32>
    %27 = arith.maximumf %24, %26 : vector<8x1xf32>
    %28 = arith.subf %24, %27 : vector<8x1xf32>
    %29 = math.exp %28 : vector<8x1xf32>
    %30 = vector.broadcast %27 : vector<8x1xf32> to vector<8x8xf32>
    %31 = arith.subf %22, %30 : vector<8x8xf32>
    %32 = math.exp %31 : vector<8x8xf32>
    %c0_26 = arith.constant 0 : index
    %c0_27 = arith.constant 0 : index
    %c0_28 = arith.constant 0 : index
    %33 = vector.load %arg10[%c0_26, %c0_27, %c0_28] : memref<2x8x1xf32, #tpu.memory_space<vmem>>, vector<1x8x1xf32>
    %34 = vector.shape_cast %33 : vector<1x8x1xf32> to vector<8x1xf32>
    %35 = arith.mulf %29, %34 : vector<8x1xf32>
    %cst_29 = arith.constant dense<0.000000e+00> : vector<8xf32>
    %36 = vector.multi_reduction <add>, %32, %cst_29 [1] : vector<8x8xf32> to vector<8xf32>
    %37 = vector.shape_cast %36 : vector<8xf32> to vector<8x1xf32>
    %38 = arith.addf %35, %37 : vector<8x1xf32>
    %c0_30 = arith.constant 0 : index
    %c0_31 = arith.constant 0 : index
    %c0_32 = arith.constant 0 : index
    %39 = vector.load %arg10[%c0_30, %c0_31, %c0_32] : memref<2x8x1xf32, #tpu.memory_space<vmem>>, vector<1x8x1xf32>
    %40 = vector.shape_cast %39 : vector<1x8x1xf32> to vector<8x1xf32>
    %41 = vector.shape_cast %38 : vector<8x1xf32> to vector<1x8x1xf32>
    tpu.vector_store %arg10[%c0_30, %c0_31, %c0_32], %41 {strides = array<i32>} : memref<2x8x1xf32, #tpu.memory_space<vmem>>, vector<1x8x1xf32>,
    %cst_33 = arith.constant dense<0.000000e+00> : vector<8x32xf32>
    %42 = tpu.matmul %32, %10, %cst_33 {dimension_numbers = #tpu.dot_dimension_numbers<[1], [0], [0], [1], [0, 0, 1, 1], [], []>} : vector<8x8xf32>, vector<8x32xf32>, vector<8x32xf32> -> vector<8x32xf32>
    %43 = vector.shape_cast %32 : vector<8x8xf32> to vector<8x8x1xf32>
    %44 = vector.broadcast %43 : vector<8x8x1xf32> to vector<8x8x32xf32>
    %45 = arith.mulf %44, %4 : vector<8x8x32xf32>
    %cst_34 = arith.constant dense<0.000000e+00> : vector<8x32xf32>
    %46 = vector.multi_reduction <add>, %45, %cst_34 [1] : vector<8x8x32xf32> to vector<8x32xf32>
    %c0_35 = arith.constant 0 : index
    %c0_36 = arith.constant 0 : index
    %c0_37 = arith.constant 0 : index
    %47 = vector.load %arg11[%c0_35, %c0_36, %c0_37] : memref<2x8x32xf32, #tpu.memory_space<vmem>>, vector<1x8x32xf32>
    %48 = vector.shape_cast %47 : vector<1x8x32xf32> to vector<8x32xf32>
    %49 = vector.broadcast %29 : vector<8x1xf32> to vector<8x32xf32>
    %50 = arith.mulf %49, %48 : vector<8x32xf32>
    %51 = arith.addf %50, %42 : vector<8x32xf32>
    %52 = arith.addf %51, %46 : vector<8x32xf32>
    %c0_38 = arith.constant 0 : index
    %c0_39 = arith.constant 0 : index
    %c0_40 = arith.constant 0 : index
    %53 = vector.load %arg11[%c0_38, %c0_39, %c0_40] : memref<2x8x32xf32, #tpu.memory_space<vmem>>, vector<1x8x32xf32>
    %54 = vector.shape_cast %53 : vector<1x8x32xf32> to vector<8x32xf32>
    %55 = vector.shape_cast %52 : vector<8x32xf32> to vector<1x8x32xf32>
    tpu.vector_store %arg11[%c0_38, %c0_39, %c0_40], %55 {strides = array<i32>} : memref<2x8x32xf32, #tpu.memory_space<vmem>>, vector<1x8x32xf32>,
    %c0_41 = arith.constant 0 : index
    %c0_42 = arith.constant 0 : index
    %c0_43 = arith.constant 0 : index
    %56 = vector.load %arg9[%c0_41, %c0_42, %c0_43] : memref<2x8x1xf32, #tpu.memory_space<vmem>>, vector<1x8x1xf32>
    %57 = vector.shape_cast %56 : vector<1x8x1xf32> to vector<8x1xf32>
    %58 = vector.shape_cast %27 : vector<8x1xf32> to vector<1x8x1xf32>
    tpu.vector_store %arg9[%c0_41, %c0_42, %c0_43], %58 {strides = array<i32>} : memref<2x8x1xf32, #tpu.memory_space<vmem>>, vector<1x8x1xf32>,
    %c0_44 = arith.constant 0 : index
    %c1 = arith.constant 1 : index
    %c0_45 = arith.constant 0 : index
    %c0_46 = arith.constant 0 : index
    %59 = vector.load %arg3[%c0_44, %c1, %c0_45, %c0_46] : memref<1x2x8x32xf32, #tpu.memory_space<vmem>>, vector<1x1x8x32xf32>
    %60 = vector.shape_cast %59 : vector<1x1x8x32xf32> to vector<8x32xf32>
    %c0_47 = arith.constant 0 : index
    %c1_48 = arith.constant 1 : index
    %c0_49 = arith.constant 0 : index
    %c0_50 = arith.constant 0 : index
    %61 = vector.load %arg4[%c0_47, %c1_48, %c0_49, %c0_50] : memref<1x2x8x32xf32, #tpu.memory_space<vmem>>, vector<1x1x8x32xf32>
    %62 = vector.shape_cast %61 : vector<1x1x8x32xf32> to vector<8x32xf32>
    %c0_51 = arith.constant 0 : index
    %c1_52 = arith.constant 1 : index
    %c0_53 = arith.constant 0 : index
    %c0_54 = arith.constant 0 : index
    %63 = vector.load %arg5[%c0_51, %c1_52, %c0_53, %c0_54] : memref<1x2x8x32xf32, #tpu.memory_space<vmem>>, vector<1x1x8x32xf32>
    %64 = vector.shape_cast %63 : vector<1x1x8x32xf32> to vector<8x32xf32>
    %c0_55 = arith.constant 0 : index
    %c1_56 = arith.constant 1 : index
    %c0_57 = arith.constant 0 : index
    %c0_58 = arith.constant 0 : index
    %65 = vector.load %arg7[%c0_55, %c1_56, %c0_57, %c0_58] : memref<1x2x8x8xf32, #tpu.memory_space<vmem>>, vector<1x1x8x8xf32>
    %66 = vector.shape_cast %65 : vector<1x1x8x8xf32> to vector<8x8xf32>
    %67 = tpu.transpose %62, [1, 0] : vector<8x32xf32> -> vector<32x8xf32>
    %cst_59 = arith.constant dense<0.000000e+00> : vector<8x8xf32>
    %68 = tpu.matmul %60, %67, %cst_59 {dimension_numbers = #tpu.dot_dimension_numbers<[1], [0], [0], [1], [0, 0, 1, 1], [], []>} : vector<8x32xf32>, vector<32x8xf32>, vector<8x8xf32> -> vector<8x8xf32>
    %cst_60 = arith.constant 0.176776692 : f32
    %69 = vector.broadcast %cst_60 : f32 to vector<8x8xf32>
    %70 = arith.mulf %68, %69 : vector<8x8xf32>
    %71 = vector.shape_cast %60 : vector<8x32xf32> to vector<8x1x32xf32>
    %72 = vector.broadcast %71 : vector<8x1x32xf32> to vector<8x8x32xf32>
    %73 = arith.mulf %72, %4 : vector<8x8x32xf32>
    %cst_61 = arith.constant dense<0.000000e+00> : vector<8x8xf32>
    %74 = vector.multi_reduction <add>, %73, %cst_61 [2] : vector<8x8x32xf32> to vector<8x8xf32>
    %75 = arith.addf %70, %74 : vector<8x8xf32>
    %76 = arith.addf %75, %66 : vector<8x8xf32>
    %c1_62 = arith.constant 1 : index
    %c0_63 = arith.constant 0 : index
    %c0_64 = arith.constant 0 : index
    %77 = vector.load %arg9[%c1_62, %c0_63, %c0_64] : memref<2x8x1xf32, #tpu.memory_space<vmem>>, vector<1x8x1xf32>
    %78 = vector.shape_cast %77 : vector<1x8x1xf32> to vector<8x1xf32>
    %cst_65 = arith.constant dense<0xFF800000> : vector<8xf32>
    %79 = vector.multi_reduction <maximumf>, %76, %cst_65 [1] : vector<8x8xf32> to vector<8xf32>
    %80 = vector.shape_cast %79 : vector<8xf32> to vector<8x1xf32>
    %81 = arith.maximumf %78, %80 : vector<8x1xf32>
    %82 = arith.subf %78, %81 : vector<8x1xf32>
    %83 = math.exp %82 : vector<8x1xf32>
    %84 = vector.broadcast %81 : vector<8x1xf32> to vector<8x8xf32>
    %85 = arith.subf %76, %84 : vector<8x8xf32>
    %86 = math.exp %85 : vector<8x8xf32>
    %c1_66 = arith.constant 1 : index
    %c0_67 = arith.constant 0 : index
    %c0_68 = arith.constant 0 : index
    %87 = vector.load %arg10[%c1_66, %c0_67, %c0_68] : memref<2x8x1xf32, #tpu.memory_space<vmem>>, vector<1x8x1xf32>
    %88 = vector.shape_cast %87 : vector<1x8x1xf32> to vector<8x1xf32>
    %89 = arith.mulf %83, %88 : vector<8x1xf32>
    %cst_69 = arith.constant dense<0.000000e+00> : vector<8xf32>
    %90 = vector.multi_reduction <add>, %86, %cst_69 [1] : vector<8x8xf32> to vector<8xf32>
    %91 = vector.shape_cast %90 : vector<8xf32> to vector<8x1xf32>
    %92 = arith.addf %89, %91 : vector<8x1xf32>
    %c1_70 = arith.constant 1 : index
    %c0_71 = arith.constant 0 : index
    %c0_72 = arith.constant 0 : index
    %93 = vector.load %arg10[%c1_70, %c0_71, %c0_72] : memref<2x8x1xf32, #tpu.memory_space<vmem>>, vector<1x8x1xf32>
    %94 = vector.shape_cast %93 : vector<1x8x1xf32> to vector<8x1xf32>
    %95 = vector.shape_cast %92 : vector<8x1xf32> to vector<1x8x1xf32>
    tpu.vector_store %arg10[%c1_70, %c0_71, %c0_72], %95 {strides = array<i32>} : memref<2x8x1xf32, #tpu.memory_space<vmem>>, vector<1x8x1xf32>,
    %cst_73 = arith.constant dense<0.000000e+00> : vector<8x32xf32>
    %96 = tpu.matmul %86, %64, %cst_73 {dimension_numbers = #tpu.dot_dimension_numbers<[1], [0], [0], [1], [0, 0, 1, 1], [], []>} : vector<8x8xf32>, vector<8x32xf32>, vector<8x32xf32> -> vector<8x32xf32>
    %97 = vector.shape_cast %86 : vector<8x8xf32> to vector<8x8x1xf32>
    %98 = vector.broadcast %97 : vector<8x8x1xf32> to vector<8x8x32xf32>
    %99 = arith.mulf %98, %4 : vector<8x8x32xf32>
    %cst_74 = arith.constant dense<0.000000e+00> : vector<8x32xf32>
    %100 = vector.multi_reduction <add>, %99, %cst_74 [1] : vector<8x8x32xf32> to vector<8x32xf32>
    %c1_75 = arith.constant 1 : index
    %c0_76 = arith.constant 0 : index
    %c0_77 = arith.constant 0 : index
    %101 = vector.load %arg11[%c1_75, %c0_76, %c0_77] : memref<2x8x32xf32, #tpu.memory_space<vmem>>, vector<1x8x32xf32>
    %102 = vector.shape_cast %101 : vector<1x8x32xf32> to vector<8x32xf32>
    %103 = vector.broadcast %83 : vector<8x1xf32> to vector<8x32xf32>
    %104 = arith.mulf %103, %102 : vector<8x32xf32>
    %105 = arith.addf %104, %96 : vector<8x32xf32>
    %106 = arith.addf %105, %100 : vector<8x32xf32>
    %c1_78 = arith.constant 1 : index
    %c0_79 = arith.constant 0 : index
    %c0_80 = arith.constant 0 : index
    %107 = vector.load %arg11[%c1_78, %c0_79, %c0_80] : memref<2x8x32xf32, #tpu.memory_space<vmem>>, vector<1x8x32xf32>
    %108 = vector.shape_cast %107 : vector<1x8x32xf32> to vector<8x32xf32>
    %109 = vector.shape_cast %106 : vector<8x32xf32> to vector<1x8x32xf32>
    tpu.vector_store %arg11[%c1_78, %c0_79, %c0_80], %109 {strides = array<i32>} : memref<2x8x32xf32, #tpu.memory_space<vmem>>, vector<1x8x32xf32>,
    %c1_81 = arith.constant 1 : index
    %c0_82 = arith.constant 0 : index
    %c0_83 = arith.constant 0 : index
    %110 = vector.load %arg9[%c1_81, %c0_82, %c0_83] : memref<2x8x1xf32, #tpu.memory_space<vmem>>, vector<1x8x1xf32>
    %111 = vector.shape_cast %110 : vector<1x8x1xf32> to vector<8x1xf32>
    %112 = vector.shape_cast %81 : vector<8x1xf32> to vector<1x8x1xf32>
    tpu.vector_store %arg9[%c1_81, %c0_82, %c0_83], %112 {strides = array<i32>} : memref<2x8x1xf32, #tpu.memory_space<vmem>>, vector<1x8x1xf32>,
    %c0_i32_84 = arith.constant 0 : i32
    %113 = arith.cmpi eq, %arg2, %c0_i32_84 : i32
    %114 = arith.extui %113 : i1 to i32
    %c0_i32_85 = arith.constant 0 : i32
    %115 = arith.cmpi ne, %114, %c0_i32_85 : i32
    scf.if %115 {
      %c0_86 = arith.constant 0 : index
      %c0_87 = arith.constant 0 : index
      %c0_88 = arith.constant 0 : index
      %116 = vector.load %arg10[%c0_86, %c0_87, %c0_88] : memref<2x8x1xf32, #tpu.memory_space<vmem>>, vector<2x8x1xf32>
      %117 = tpu.reciprocal %116 {approx = true} : vector<2x8x1xf32> -> vector<2x8x1xf32>
      %c0_89 = arith.constant 0 : index
      %c0_90 = arith.constant 0 : index
      %c0_91 = arith.constant 0 : index
      %118 = vector.load %arg11[%c0_89, %c0_90, %c0_91] : memref<2x8x32xf32, #tpu.memory_space<vmem>>, vector<2x8x32xf32>
      %119 = vector.broadcast %117 : vector<2x8x1xf32> to vector<2x8x32xf32>
      %120 = arith.mulf %118, %119 : vector<2x8x32xf32>
      %c0_92 = arith.constant 0 : index
      %c0_93 = arith.constant 0 : index
      %c0_94 = arith.constant 0 : index
      %c0_95 = arith.constant 0 : index
      %121 = vector.load %arg8[%c0_92, %c0_93, %c0_94, %c0_95] : memref<1x2x8x32xf32, #tpu.memory_space<vmem>>, vector<1x2x8x32xf32>
      %122 = vector.shape_cast %121 : vector<1x2x8x32xf32> to vector<2x8x32xf32>
      %123 = vector.shape_cast %120 : vector<2x8x32xf32> to vector<1x2x8x32xf32>
      tpu.vector_store %arg8[%c0_92, %c0_93, %c0_94, %c0_95], %123 {strides = array<i32>} : memref<1x2x8x32xf32, #tpu.memory_space<vmem>>, vector<1x2x8x32xf32>,
    } else {
    }
    return
  }
  func.func @transform_0(%arg0: i32, %arg1: i32, %arg2: i32) -> (i32, i32, i32, i32) {
    %c0_i32 = arith.constant 0 : i32
    %c0_i32_0 = arith.constant 0 : i32
    %c0_i32_1 = arith.constant 0 : i32
    return %arg0, %c0_i32, %arg1, %c0_i32_0 : i32, i32, i32, i32
  }
  func.func @transform_1(%arg0: i32, %arg1: i32, %arg2: i32) -> (i32, i32, i32, i32) {
    %c0_i32 = arith.constant 0 : i32
    %c0_i32_0 = arith.constant 0 : i32
    %c0_i32_1 = arith.constant 0 : i32
    return %arg0, %c0_i32, %arg2, %c0_i32_0 : i32, i32, i32, i32
  }
  func.func @transform_2(%arg0: i32, %arg1: i32, %arg2: i32) -> (i32, i32, i32, i32) {
    %c0_i32 = arith.constant 0 : i32
    %c0_i32_0 = arith.constant 0 : i32
    %c0_i32_1 = arith.constant 0 : i32
    return %arg0, %c0_i32, %arg2, %c0_i32_0 : i32, i32, i32, i32
  }
  func.func @transform_3(%arg0: i32, %arg1: i32, %arg2: i32) -> (i32, i32, i32, i32) {
    %c0_i32 = arith.constant 0 : i32
    %c0_i32_0 = arith.constant 0 : i32
    return %arg0, %arg1, %arg2, %c0_i32 : i32, i32, i32, i32
  }
  func.func @transform_4(%arg0: i32, %arg1: i32, %arg2: i32) -> (i32, i32, i32, i32) {
    %c0_i32 = arith.constant 0 : i32
    %c0_i32_0 = arith.constant 0 : i32
    return %arg0, %c0_i32, %arg1, %arg2 : i32, i32, i32, i32
  }
  func.func @transform_5(%arg0: i32, %arg1: i32, %arg2: i32) -> (i32, i32, i32, i32) {
    %c0_i32 = arith.constant 0 : i32
    %c0_i32_0 = arith.constant 0 : i32
    %c0_i32_1 = arith.constant 0 : i32
    return %arg0, %c0_i32, %arg1, %c0_i32_0 : i32, i32, i32, i32
  }
}

</mosaic_0001>

<llo_original>
// kernel: tpu_custom_call.1
$region0: #{tpu_custom_call.1}
  #allocation0 [shape = 'u32[]', space=smem, size = 0x4, offset = 0x4, fixed_abs, tag = 'smem constant byte address 0x4 - core index']
  #allocation1 [shape = 'u32[144,128]{1,0:T(1,128)}', space=vmem, size = 0x12000, scoped, tag = 'internal scratch']
  #allocation2 [shape = 'f32[2,8,1]{2,1,0:T(8,128)}', space=vmem, size = 0x2000, scoped, tag = 'scratch operand']
  #allocation3 [shape = 'f32[2,8,1]{2,1,0:T(8,128)}', space=vmem, size = 0x2000, scoped, tag = 'scratch operand']
  #allocation4 [shape = 'f32[2,8,32]{2,1,0:T(8,128)}', space=vmem, size = 0x2000, scoped, tag = 'scratch operand']
  %s0 = inlined_call_operand.hbm [shape: f32[2,2,8,32], index: 0, kind: input, shape index: {}]
  %s1 = inlined_call_operand.hbm [shape: f32[2,2,8,32], index: 1, kind: input, shape index: {}]
  %s2 = inlined_call_operand.hbm [shape: f32[2,2,8,32], index: 2, kind: input, shape index: {}]
  %s3 = inlined_call_operand.hbm [shape: f32[2,8,8,32], index: 3, kind: input, shape index: {}]
  %s4 = inlined_call_operand.hbm [shape: f32[2,2,8,8], index: 4, kind: input, shape index: {}]
  %s5 = inlined_call_operand.hbm [shape: f32[2,2,8,32], index: 5, kind: output, shape index: {}]
  %s6 = sld [smem:[#allocation0]]
  $region81: #{tpu_custom_call.1} parent=0
    _
  %s8 = ssub.s32 1, %s6
  %s9 = scalar_select 0, %s8, %s6
  $region1: #{tpu_custom_call.1} parent=0
    #allocation5 [shape = 'u8[16384]{0}', space=vmem, size = 0x4000, scoped, tag = 'input window, operand 0']
    #allocation6 [shape = 's32[2]{0}', space=sflag, size = 0x8, scoped, tag = 'scoped memory for tpu_custom_call.1']
    #allocation7 [shape = 's32[2]{0}', space=sflag, size = 0x8, scoped, tag = 'scoped memory for tpu_custom_call.1']
    #allocation8 [shape = 'u8[16384]{0}', space=vmem, size = 0x4000, scoped, tag = 'input window, operand 1']
    #allocation9 [shape = 's32[2]{0}', space=sflag, size = 0x8, scoped, tag = 'scoped memory for tpu_custom_call.1']
    #allocation10 [shape = 'u8[16384]{0}', space=vmem, size = 0x4000, scoped, tag = 'input window, operand 2']
    #allocation11 [shape = 'u8[65536]{0}', space=vmem, size = 0x10000, scoped, tag = 'input window, operand 3']
    #allocation12 [shape = 's32[2]{0}', space=sflag, size = 0x8, scoped, tag = 'scoped memory for tpu_custom_call.1']
    #allocation13 [shape = 'u8[16384]{0}', space=vmem, size = 0x4000, scoped, tag = 'input window, operand 4']
    #allocation14 [shape = 'u8[16384]{0}', space=vmem, size = 0x4000, scoped, tag = 'output window, operand 0']
    %10 = vsyncpa [#allocation6], 0
    %s11 = scalar_lea.sflag [#allocation6], 1
    %12 = vsyncpa %s11, 0
    %13 = vsyncpa [#allocation9], 0
    %s14 = scalar_lea.sflag [#allocation9], 1
    %15 = vsyncpa %s14, 0
    %16 = vsyncpa [#allocation12], 0
    %s17 = scalar_lea.sflag [#allocation12], 1
    %18 = vsyncpa %s17, 0
    %19 = vsyncpa [#allocation7], 0
    %s20 = scalar_lea.sflag [#allocation7], 1
    %21 = vsyncpa %s20, 0
    loop: start=0, step=1, limit=4
    $region2: #{tpu_custom_call.1} parent=1 // loop_pre_header
      _
    $region3: #{tpu_custom_call.1} parent=1 // loop_header
      %s23 = sphi 0, %s27
      %p24 = scmp.ge.s32.totalorder %s23, 4
      %s30 = sphi 0, %s49
      %s31 = sphi 0, %s45
      %s32 = sphi 0, %s41
      %s33 = sphi 0, %s30
      %s34 = sphi 0, %s31
      %s35 = sphi 0, %s32
      %s36 = sphi 0, %s33
      %s37 = sphi 0, %s34
      %s38 = sphi 0, %s35
      %s54 = sphi 0, %s56
      %s57 = sphi 0, %s54
      %s58 = sphi 0, %s57
      %s74 = sphi 0, %s58
      %s82 = sphi 0, %s84
      %s85 = sphi 0, %s82
      %s86 = sphi 0, %s85
      %s102 = sphi 0, %s86
      %s110 = sphi 0, %s112
      %s113 = sphi 0, %s110
      %s114 = sphi 0, %s113
      %s130 = sphi 0, %s114
      %s140 = sphi 0, %s142
      %s143 = sphi 0, %s140
      %s144 = sphi 0, %s143
      %s160 = sphi 0, %s144
      %s170 = sphi 0, %s172
      %s173 = sphi 0, %s170
      %s174 = sphi 0, %s173
      %s190 = sphi 0, %s174
      %s198 = sphi 0, %s200
      %s201 = sphi 0, %s198
      %s202 = sphi 0, %s201
      %s218 = sphi 0, %s202
    $region4: #{tpu_custom_call.1} parent=1 // loop_header_branch
      %26 = sbr.rel (%p24) target = $region8
    $region5: #{tpu_custom_call.1} parent=1 // loop_body
      %s28 = ssub.s32 %s23, 1
      %s29 = ssub.s32 %s23, 2
      %s39 = sadd.s32 1, %s32
      %p40 = scmp.ge.s32.totalorder %s39, 1
      %s41 = scalar_select %p40, 0, %s39
      %s42 = sadd.s32 1, %s31
      %s43 = scalar_select %p40, %s42, %s31
      %p44 = scmp.ge.s32.totalorder %s43, 1
      %s45 = scalar_select %p44, 0, %s43
      %s46 = sadd.s32 1, %s30
      %s47 = scalar_select %p44, %s46, %s30
      %p48 = scmp.ge.s32.totalorder %s47, 2
      %s49 = scalar_select %p48, 0, %s47
      %s50 = ssub.s32 %s30, %s49
      %s51 = ssub.s32 %s31, %s45
      %s52 = sor.u32 %s50, %s51
      %p53 = scmp.eq.s32.totalorder %s52, 0
      %s55 = sadd.s32 %s54, 1
      %s56 = scalar_select %p53, %s54, %s55
      %p59 = pneg %p53
      %p60 = scmp.eq.s32.totalorder %s23, 1
      %p61 = por %p59, %p60
      %p62 = scmp.ne.s32.totalorder %s54, %s57
      %p63 = scmp.eq.s32.totalorder %s23, 0
      %p64 = por %p62, %p63
      %p65 = scmp.ne.s32.totalorder %s54, %s57
      %p66 = scmp.eq.s32.totalorder %s28, 1
      %p67 = por %p65, %p66
      %p68 = scmp.ne.s32.totalorder %s57, %s58
      %p69 = scmp.eq.s32.totalorder %s28, 0
      %p70 = por %p68, %p69
      %p71 = scmp.ne.s32.totalorder %s57, %s58
      %p72 = scmp.eq.s32.totalorder %s29, 1
      %p73 = por %p71, %p72
      %p75 = scmp.ne.s32.totalorder %s58, %s74
      %p76 = scmp.eq.s32.totalorder %s29, 0
      %p77 = por %p75, %p76
      %s78 = ssub.s32 %s30, %s49
      %s79 = ssub.s32 %s32, %s41
      %s80 = sor.u32 %s78, %s79
      %p81 = scmp.eq.s32.totalorder %s80, 0
      %s83 = sadd.s32 %s82, 1
      %s84 = scalar_select %p81, %s82, %s83
      %p87 = pneg %p81
      %p88 = scmp.eq.s32.totalorder %s23, 1
      %p89 = por %p87, %p88
      %p90 = scmp.ne.s32.totalorder %s82, %s85
      %p91 = scmp.eq.s32.totalorder %s23, 0
      %p92 = por %p90, %p91
      %p93 = scmp.ne.s32.totalorder %s82, %s85
      %p94 = scmp.eq.s32.totalorder %s28, 1
      %p95 = por %p93, %p94
      %p96 = scmp.ne.s32.totalorder %s85, %s86
      %p97 = scmp.eq.s32.totalorder %s28, 0
      %p98 = por %p96, %p97
      %p99 = scmp.ne.s32.totalorder %s85, %s86
      %p100 = scmp.eq.s32.totalorder %s29, 1
      %p101 = por %p99, %p100
      %p103 = scmp.ne.s32.totalorder %s86, %s102
      %p104 = scmp.eq.s32.totalorder %s29, 0
      %p105 = por %p103, %p104
      %s106 = ssub.s32 %s30, %s49
      %s107 = ssub.s32 %s32, %s41
      %s108 = sor.u32 %s106, %s107
      %p109 = scmp.eq.s32.totalorder %s108, 0
      %s111 = sadd.s32 %s110, 1
      %s112 = scalar_select %p109, %s110, %s111
      %p115 = pneg %p109
      %p116 = scmp.eq.s32.totalorder %s23, 1
      %p117 = por %p115, %p116
      %p118 = scmp.ne.s32.totalorder %s110, %s113
      %p119 = scmp.eq.s32.totalorder %s23, 0
      %p120 = por %p118, %p119
      %p121 = scmp.ne.s32.totalorder %s110, %s113
      %p122 = scmp.eq.s32.totalorder %s28, 1
      %p123 = por %p121, %p122
      %p124 = scmp.ne.s32.totalorder %s113, %s114
      %p125 = scmp.eq.s32.totalorder %s28, 0
      %p126 = por %p124, %p125
      %p127 = scmp.ne.s32.totalorder %s113, %s114
      %p128 = scmp.eq.s32.totalorder %s29, 1
      %p129 = por %p127, %p128
      %p131 = scmp.ne.s32.totalorder %s114, %s130
      %p132 = scmp.eq.s32.totalorder %s29, 0
      %p133 = por %p131, %p132
      %s134 = ssub.s32 %s30, %s49
      %s135 = ssub.s32 %s31, %s45
      %s136 = sor.u32 %s134, %s135
      %s137 = ssub.s32 %s32, %s41
      %s138 = sor.u32 %s136, %s137
      %p139 = scmp.eq.s32.totalorder %s138, 0
      %s141 = sadd.s32 %s140, 1
      %s142 = scalar_select %p139, %s140, %s141
      %p145 = pneg %p139
      %p146 = scmp.eq.s32.totalorder %s23, 1
      %p147 = por %p145, %p146
      %p148 = scmp.ne.s32.totalorder %s140, %s143
      %p149 = scmp.eq.s32.totalorder %s23, 0
      %p150 = por %p148, %p149
      %p151 = scmp.ne.s32.totalorder %s140, %s143
      %p152 = scmp.eq.s32.totalorder %s28, 1
      %p153 = por %p151, %p152
      %p154 = scmp.ne.s32.totalorder %s143, %s144
      %p155 = scmp.eq.s32.totalorder %s28, 0
      %p156 = por %p154, %p155
      %p157 = scmp.ne.s32.totalorder %s143, %s144
      %p158 = scmp.eq.s32.totalorder %s29, 1
      %p159 = por %p157, %p158
      %p161 = scmp.ne.s32.totalorder %s144, %s160
      %p162 = scmp.eq.s32.totalorder %s29, 0
      %p163 = por %p161, %p162
      %s164 = ssub.s32 %s30, %s49
      %s165 = ssub.s32 %s31, %s45
      %s166 = sor.u32 %s164, %s165
      %s167 = ssub.s32 %s32, %s41
      %s168 = sor.u32 %s166, %s167
      %p169 = scmp.eq.s32.totalorder %s168, 0
      %s171 = sadd.s32 %s170, 1
      %s172 = scalar_select %p169, %s170, %s171
      %p175 = pneg %p169
      %p176 = scmp.eq.s32.totalorder %s23, 1
      %p177 = por %p175, %p176
      %p178 = scmp.ne.s32.totalorder %s170, %s173
      %p179 = scmp.eq.s32.totalorder %s23, 0
      %p180 = por %p178, %p179
      %p181 = scmp.ne.s32.totalorder %s170, %s173
      %p182 = scmp.eq.s32.totalorder %s28, 1
      %p183 = por %p181, %p182
      %p184 = scmp.ne.s32.totalorder %s173, %s174
      %p185 = scmp.eq.s32.totalorder %s28, 0
      %p186 = por %p184, %p185
      %p187 = scmp.ne.s32.totalorder %s173, %s174
      %p188 = scmp.eq.s32.totalorder %s29, 1
      %p189 = por %p187, %p188
      %p191 = scmp.ne.s32.totalorder %s174, %s190
      %p192 = scmp.eq.s32.totalorder %s29, 0
      %p193 = por %p191, %p192
      %s194 = ssub.s32 %s30, %s49
      %s195 = ssub.s32 %s31, %s45
      %s196 = sor.u32 %s194, %s195
      %p197 = scmp.eq.s32.totalorder %s196, 0
      %s199 = sadd.s32 %s198, 1
      %s200 = scalar_select %p197, %s198, %s199
      %p203 = pneg %p197
      %p204 = scmp.eq.s32.totalorder %s23, 1
      %p205 = por %p203, %p204
      %p206 = scmp.ne.s32.totalorder %s198, %s201
      %p207 = scmp.eq.s32.totalorder %s23, 0
      %p208 = por %p206, %p207
      %p209 = scmp.ne.s32.totalorder %s198, %s201
      %p210 = scmp.eq.s32.totalorder %s28, 1
      %p211 = por %p209, %p210
      %p212 = scmp.ne.s32.totalorder %s201, %s202
      %p213 = scmp.eq.s32.totalorder %s28, 0
      %p214 = por %p212, %p213
      %p215 = scmp.ne.s32.totalorder %s201, %s202
      %p216 = scmp.eq.s32.totalorder %s29, 1
      %p217 = por %p215, %p216
      %p219 = scmp.ne.s32.totalorder %s202, %s218
      %p220 = scmp.eq.s32.totalorder %s29, 0
      %p221 = por %p219, %p220
      %p222 = scmp.le.s32.totalorder 1, %s23
      %p223 = scmp.lt.s32.totalorder %s23, 3
      %p224 = pnand %p222, %p223
      %p225 = pneg %p224
      // Predicated region
      $region9: #{tpu_custom_call.1} parent=5 // pred_check
        _
      $region10: #{tpu_custom_call.1} parent=5 // pred_check_branch
        %227 = sbr.rel (%p224) target = $region12
      $region11: #{tpu_custom_call.1} parent=5 // pred_region
        %s228 = ssub.s32 %s23, 1
      $region12: #{tpu_custom_call.1} parent=5 // pred_fallthru
        _
      %p229 = scmp.lt.s32.totalorder %s23, 2
      // Predicated region
      $region13: #{tpu_custom_call.1} parent=5 // pred_check
        %p230 = pneg %p229
      $region14: #{tpu_custom_call.1} parent=5 // pred_check_branch
        %232 = sbr.rel (%p230) target = $region16
      $region15: #{tpu_custom_call.1} parent=5 // pred_region
        // Predicated region
        $region17: #{tpu_custom_call.1} parent=15 // pred_check
          %p233 = pneg %p64
        $region18: #{tpu_custom_call.1} parent=15 // pred_check_branch
          %235 = sbr.rel (%p233) target = $region20
        $region19: #{tpu_custom_call.1} parent=15 // pred_region
          %s236 = sand.u32 %s54, 1
          %s237 = scalar_lea.sflag [#allocation6], %s236
          %s238 = sand.u32 %s54, 1
          %s239 = smul.addr %s238, 16
          %s240 = scalar_lea.vmem [#allocation5], %s239
          %s242 = ssub.s32 256, 256
          %243 = vsyncadd %s237, %s242
          %s244 = smul.addr %s30, 2
          %s245 = sadd.s32 %s31, %s244
          %s246 = smul.addr %s245, 128
          %s247 = scalar_lea.hbm %s0, %s246
          %s248 = sshll.u32 %s240, 4
          %s249 = int_to_ptr.vmem [resolvable:$true] %s248
          %254 = dma.hbm_to_vmem [thread:$0]  %s247, 256, %s249, %s237, 128, 128, 8
        $region20: #{tpu_custom_call.1} parent=15 // pred_fallthru
          _
        // Predicated region
        $region21: #{tpu_custom_call.1} parent=15 // pred_check
          %p255 = pneg %p92
        $region22: #{tpu_custom_call.1} parent=15 // pred_check_branch
          %257 = sbr.rel (%p255) target = $region24
        $region23: #{tpu_custom_call.1} parent=15 // pred_region
          %s258 = sand.u32 %s23, 1
          %s259 = scalar_lea.sflag [#allocation9], %s258
          %s260 = sand.u32 %s82, 1
          %s261 = smul.addr %s260, 16
          %s262 = scalar_lea.vmem [#allocation8], %s261
          %s264 = ssub.s32 256, 256
          %265 = vsyncadd %s259, %s264
          %s266 = smul.addr %s30, 2
          %s267 = sadd.s32 %s32, %s266
          %s268 = smul.addr %s267, 128
          %s269 = scalar_lea.hbm %s1, %s268
          %s270 = sshll.u32 %s262, 4
          %s271 = int_to_ptr.vmem [resolvable:$true] %s270
          %276 = dma.hbm_to_vmem [thread:$0]  %s269, 256, %s271, %s259, 128, 128, 8
        $region24: #{tpu_custom_call.1} parent=15 // pred_fallthru
          _
        // Predicated region
        $region25: #{tpu_custom_call.1} parent=15 // pred_check
          %p277 = pneg %p120
        $region26: #{tpu_custom_call.1} parent=15 // pred_check_branch
          %279 = sbr.rel (%p277) target = $region28
        $region27: #{tpu_custom_call.1} parent=15 // pred_region
          %s280 = sand.u32 %s23, 1
          %s281 = scalar_lea.sflag [#allocation9], %s280
          %s282 = sand.u32 %s110, 1
          %s283 = smul.addr %s282, 16
          %s284 = scalar_lea.vmem [#allocation10], %s283
          %s286 = ssub.s32 256, 256
          %287 = vsyncadd %s281, %s286
          %s288 = smul.addr %s30, 2
          %s289 = sadd.s32 %s32, %s288
          %s290 = smul.addr %s289, 128
          %s291 = scalar_lea.hbm %s2, %s290
          %s292 = sshll.u32 %s284, 4
          %s293 = int_to_ptr.vmem [resolvable:$true] %s292
          %298 = dma.hbm_to_vmem [thread:$0]  %s291, 256, %s293, %s281, 128, 128, 8
        $region28: #{tpu_custom_call.1} parent=15 // pred_fallthru
          _
        // Predicated region
        $region29: #{tpu_custom_call.1} parent=15 // pred_check
          %p299 = pneg %p150
        $region30: #{tpu_custom_call.1} parent=15 // pred_check_branch
          %301 = sbr.rel (%p299) target = $region32
        $region31: #{tpu_custom_call.1} parent=15 // pred_region
          %s302 = sand.u32 %s23, 1
          %s303 = scalar_lea.sflag [#allocation12], %s302
          %s304 = sand.u32 %s140, 1
          %s305 = smul.addr %s304, 64
          %s306 = scalar_lea.vmem [#allocation11], %s305
          %s307 = smul.u32 8, %s31
          %s309 = ssub.s32 1024, 1024
          %310 = vsyncadd %s303, %s309
          %s311 = sadd.s32 %s32, %s307
          %s312 = smul.addr %s30, 8
          %s313 = sadd.s32 %s311, %s312
          %s314 = smul.addr %s313, 128
          %s315 = scalar_lea.hbm %s3, %s314
          %s316 = sshll.u32 %s306, 4
          %s317 = int_to_ptr.vmem [resolvable:$true] %s316
          %322 = dma.hbm_to_vmem [thread:$0]  %s315, 1024, %s317, %s303, 128, 128, 8
        $region32: #{tpu_custom_call.1} parent=15 // pred_fallthru
          _
        // Predicated region
        $region33: #{tpu_custom_call.1} parent=15 // pred_check
          %p323 = pneg %p180
        $region34: #{tpu_custom_call.1} parent=15 // pred_check_branch
          %325 = sbr.rel (%p323) target = $region36
        $region35: #{tpu_custom_call.1} parent=15 // pred_region
          %s326 = sand.u32 %s23, 1
          %s327 = scalar_lea.sflag [#allocation12], %s326
          %s328 = sand.u32 %s170, 1
          %s329 = smul.addr %s328, 16
          %s330 = scalar_lea.vmem [#allocation13], %s329
          %s332 = ssub.s32 256, 256
          %333 = vsyncadd %s327, %s332
          %s334 = sadd.s32 %s32, %s31
          %s335 = smul.addr %s30, 2
          %s336 = sadd.s32 %s334, %s335
          %s337 = smul.addr %s336, 128
          %s338 = scalar_lea.hbm %s4, %s337
          %s339 = sshll.u32 %s330, 4
          %s340 = int_to_ptr.vmem [resolvable:$true] %s339
          %345 = dma.hbm_to_vmem [thread:$0]  %s338, 256, %s340, %s327, 128, 128, 8
        $region36: #{tpu_custom_call.1} parent=15 // pred_fallthru
          _
      $region16: #{tpu_custom_call.1} parent=5 // pred_fallthru
        _
      %p346 = scmp.le.s32.totalorder 1, %s23
      %p347 = scmp.lt.s32.totalorder %s23, 3
      %p348 = pnand %p346, %p347
      %p349 = pneg %p348
      // Predicated region
      $region37: #{tpu_custom_call.1} parent=5 // pred_check
        _
      $region38: #{tpu_custom_call.1} parent=5 // pred_check_branch
        %351 = sbr.rel (%p348) target = $region40
      $region39: #{tpu_custom_call.1} parent=5 // pred_region
        %s352 = ssub.s32 %s23, 1
        %s353 = sand.u32 %s57, 1
        %s354 = scalar_lea.sflag [#allocation6], %s353
        %s355 = sand.u32 %s57, 1
        %s356 = smul.addr %s355, 16
        %s357 = scalar_lea.vmem [#allocation5], %s356
        // Predicated region
        $region41: #{tpu_custom_call.1} parent=39 // pred_check
          %p358 = pneg %p70
        $region42: #{tpu_custom_call.1} parent=39 // pred_check_branch
          %360 = sbr.rel (%p358) target = $region44
        $region43: #{tpu_custom_call.1} parent=39 // pred_region
          %361 = dma.done %s354, 256
        $region44: #{tpu_custom_call.1} parent=39 // pred_fallthru
          _
        %s362 = sand.u32 %s28, 1
        %s363 = scalar_lea.sflag [#allocation9], %s362
        %s364 = sand.u32 %s85, 1
        %s365 = smul.addr %s364, 16
        %s366 = scalar_lea.vmem [#allocation8], %s365
        // Predicated region
        $region45: #{tpu_custom_call.1} parent=39 // pred_check
          %p367 = pneg %p98
        $region46: #{tpu_custom_call.1} parent=39 // pred_check_branch
          %369 = sbr.rel (%p367) target = $region48
        $region47: #{tpu_custom_call.1} parent=39 // pred_region
          %370 = dma.done %s363, 256
        $region48: #{tpu_custom_call.1} parent=39 // pred_fallthru
          _
        %s371 = sand.u32 %s28, 1
        %s372 = scalar_lea.sflag [#allocation9], %s371
        %s373 = sand.u32 %s113, 1
        %s374 = smul.addr %s373, 16
        %s375 = scalar_lea.vmem [#allocation10], %s374
        // Predicated region
        $region49: #{tpu_custom_call.1} parent=39 // pred_check
          %p376 = pneg %p126
        $region50: #{tpu_custom_call.1} parent=39 // pred_check_branch
          %378 = sbr.rel (%p376) target = $region52
        $region51: #{tpu_custom_call.1} parent=39 // pred_region
          %379 = dma.done %s372, 256
        $region52: #{tpu_custom_call.1} parent=39 // pred_fallthru
          _
        %s380 = sand.u32 %s28, 1
        %s381 = scalar_lea.sflag [#allocation12], %s380
        %s382 = sand.u32 %s143, 1
        %s383 = smul.addr %s382, 64
        %s384 = scalar_lea.vmem [#allocation11], %s383
        // Predicated region
        $region53: #{tpu_custom_call.1} parent=39 // pred_check
          %p385 = pneg %p156
        $region54: #{tpu_custom_call.1} parent=39 // pred_check_branch
          %387 = sbr.rel (%p385) target = $region56
        $region55: #{tpu_custom_call.1} parent=39 // pred_region
          %388 = dma.done %s381, 1024
        $region56: #{tpu_custom_call.1} parent=39 // pred_fallthru
          _
        %s389 = sand.u32 %s28, 1
        %s390 = scalar_lea.sflag [#allocation12], %s389
        %s391 = sand.u32 %s173, 1
        %s392 = smul.addr %s391, 16
        %s393 = scalar_lea.vmem [#allocation13], %s392
        // Predicated region
        $region57: #{tpu_custom_call.1} parent=39 // pred_check
          %p394 = pneg %p186
        $region58: #{tpu_custom_call.1} parent=39 // pred_check_branch
          %396 = sbr.rel (%p394) target = $region60
        $region59: #{tpu_custom_call.1} parent=39 // pred_region
          %397 = dma.done %s390, 256
        $region60: #{tpu_custom_call.1} parent=39 // pred_fallthru
          _
        %s398 = sand.u32 %s57, 1
        %s399 = scalar_lea.sflag [#allocation6], %s398
        %s400 = sand.u32 %s57, 1
        %s401 = smul.addr %s400, 16
        %s402 = scalar_lea.vmem [#allocation5], %s401
        %p403 = pneg %p70
        %p404 = pneg %p67
        %s405 = sand.u32 %s28, 1
        %s406 = scalar_lea.sflag [#allocation9], %s405
        %s407 = sand.u32 %s85, 1
        %s408 = smul.addr %s407, 16
        %s409 = scalar_lea.vmem [#allocation8], %s408
        %p410 = pneg %p98
        %p411 = pneg %p95
        %s412 = sand.u32 %s28, 1
        %s413 = scalar_lea.sflag [#allocation9], %s412
        %s414 = sand.u32 %s113, 1
        %s415 = smul.addr %s414, 16
        %s416 = scalar_lea.vmem [#allocation10], %s415
        %p417 = pneg %p126
        %p418 = pneg %p123
        %s419 = sand.u32 %s28, 1
        %s420 = scalar_lea.sflag [#allocation12], %s419
        %s421 = sand.u32 %s143, 1
        %s422 = smul.addr %s421, 64
        %s423 = scalar_lea.vmem [#allocation11], %s422
        %p424 = pneg %p156
        %p425 = pneg %p153
        %s426 = sand.u32 %s28, 1
        %s427 = scalar_lea.sflag [#allocation12], %s426
        %s428 = sand.u32 %s173, 1
        %s429 = smul.addr %s428, 16
        %s430 = scalar_lea.vmem [#allocation13], %s429
        %p431 = pneg %p186
        %p432 = pneg %p183
        %p433 = pneg %p214
        %p434 = pneg %p211
        %s435 = sand.u32 %s201, 1
        %s436 = scalar_lea.sflag [#allocation7], %s435
        %s437 = sand.u32 %s201, 1
        %s438 = smul.addr %s437, 16
        %s439 = scalar_lea.vmem [#allocation14], %s438
        %s440 = smul.u32 8, %s34
        %p441 = scmp.eq.s32.totalorder %s35, 0
        // Predicated region
        $region61: #{tpu_custom_call.1} parent=39 // pred_check
          %p442 = pneg %p441
        $region62: #{tpu_custom_call.1} parent=39 // pred_check_branch
          %444 = sbr.rel (%p442) target = $region64
        $region63: #{tpu_custom_call.1} parent=39 // pred_region
          %vm445 = vcmask 7168
          %446 = vst.msk [vmem:[#allocation2] sm:$0xff] %vm445, -inf
          %447 = vst.msk [vmem:[#allocation2 + $0x8] sm:$0xff] %vm445, -inf
          %448 = vst.msk [vmem:[#allocation3] sm:$0xff] %vm445, 0.0
          %449 = vst.msk [vmem:[#allocation3 + $0x8] sm:$0xff] %vm445, 0.0
          %vm450 = vcmask 261120
          %451 = vst.msk [vmem:[#allocation4] sm:$0xff] %vm450, 0.0
          %452 = vst.msk [vmem:[#allocation4 + $0x8] sm:$0xff] %vm450, 0.0
        $region64: #{tpu_custom_call.1} parent=39 // pred_fallthru
          _
        %v453 = vld [vmem:[%s384] sm:$0xff]
        %v454 = vld [vmem:[%s384 + $0x8] sm:$0xff]
        %v455 = vld [vmem:[%s384 + $0x10] sm:$0xff]
        %v456 = vld [vmem:[%s384 + $0x18] sm:$0xff]
        %v457 = vld [vmem:[%s384 + $0x20] sm:$0xff]
        %v458 = vld [vmem:[%s384 + $0x28] sm:$0xff]
        %v459 = vld [vmem:[%s384 + $0x30] sm:$0xff]
        %v460 = vld [vmem:[%s384 + $0x38] sm:$0xff]
        %v461 = vld [vmem:[%s357] sm:$0xff]
        %v462 = vld [vmem:[%s366] sm:$0xff]
        %v463 = vld [vmem:[%s375] sm:$0xff]
        %v464 = vld [vmem:[%s393] sm:$0xff]
        %vm465 = vcmask 261120
        %v467 = vsel %vm465, %v461, 0
        %v470 = vsel %vm465, %v462, 0
        %472 = vmatprep.subr.mxu0 0.0
        %473 = vmatpush1.xpose.msra.mxu0 0.0
        %474 = vmatprep.subr.mxu0 0.0
        %475 = vmatpush1.xpose.msra.mxu0 0.0
        %476 = vmatprep.subr.mxu0 0.0
        %477 = vmatpush1.xpose.msra.mxu0 0.0
        %478 = vmatprep.subr.mxu0 0.0
        %479 = vmatpush1.xpose.msra.mxu0 0.0
        %480 = vmatprep.subr.mxu0 0.0
        %481 = vmatpush1.xpose.msra.mxu0 0.0
        %482 = vmatprep.subr.mxu0 0.0
        %483 = vmatpush1.xpose.msra.mxu0 0.0
        %484 = vmatprep.subr.mxu0 0.0
        %485 = vmatpush1.xpose.msra.mxu0 0.0
        %486 = vmatprep.subr.mxu0 0.0
        %487 = vmatpush1.xpose.msra.mxu0 0.0
        %488 = vmatprep.subr.mxu0 0.0
        %489 = vmatpush1.xpose.msra.mxu0 0.0
        %490 = vmatprep.subr.mxu0 0.0
        %491 = vmatpush1.xpose.msra.mxu0 0.0
        %492 = vmatprep.subr.mxu0 0.0
        %493 = vmatpush1.xpose.msra.mxu0 0.0
        %494 = vmatprep.subr.mxu0 0.0
        %495 = vmatpush1.xpose.msra.mxu0 0.0
        %496 = vmatprep.subr.mxu0 0.0
        %497 = vmatpush1.xpose.msra.mxu0 0.0
        %498 = vmatprep.subr.mxu0 0.0
        %499 = vmatpush1.xpose.msra.mxu0 0.0
        %500 = vmatprep.subr.mxu0 0.0
        %501 = vmatpush1.xpose.msra.mxu0 0.0
        %502 = vmatprep.subr.mxu0 0.0
        %503 = vmatpush1.xpose.msra.mxu0 %v470
        %504 = vmatprep.subr.mxu0 0.0
        %505 = vmatpush2.xpose.msra.mxu0 0.0
        %506 = vmatprep.subr.mxu0 0.0
        %507 = vmatpush2.xpose.msra.mxu0 0.0
        %508 = vmatprep.subr.mxu0 0.0
        %509 = vmatpush2.xpose.msra.mxu0 0.0
        %510 = vmatprep.subr.mxu0 0.0
        %511 = vmatpush2.xpose.msra.mxu0 0.0
        %512 = vmatprep.subr.mxu0 0.0
        %513 = vmatpush2.xpose.msra.mxu0 0.0
        %514 = vmatprep.subr.mxu0 0.0
        %515 = vmatpush2.xpose.msra.mxu0 0.0
        %516 = vmatprep.subr.mxu0 0.0
        %517 = vmatpush2.xpose.msra.mxu0 0.0
        %518 = vmatprep.subr.mxu0 0.0
        %519 = vmatpush2.xpose.msra.mxu0 0.0
        %520 = vmatprep.subr.mxu0 0.0
        %521 = vmatpush2.xpose.msra.mxu0 0.0
        %522 = vmatprep.subr.mxu0 0.0
        %523 = vmatpush2.xpose.msra.mxu0 0.0
        %524 = vmatprep.subr.mxu0 0.0
        %525 = vmatpush2.xpose.msra.mxu0 0.0
        %526 = vmatprep.subr.mxu0 0.0
        %527 = vmatpush2.xpose.msra.mxu0 0.0
        %528 = vmatprep.subr.mxu0 0.0
        %529 = vmatpush2.xpose.msra.mxu0 0.0
        %530 = vmatprep.subr.mxu0 0.0
        %531 = vmatpush2.xpose.msra.mxu0 0.0
        %532 = vmatprep.subr.mxu0 0.0
        %533 = vmatpush2.xpose.msra.mxu0 0.0
        %534 = vmatprep.subr.mxu0 0.0
        %535 = vmatpush2.xpose.msra.mxu0 0.0
        %536 = vmatprep.mubr.f32.mxu0 0.0
        %537 = vmatmul.mubr.f32.gmra.mxu0 %v467
        %v538 = vpop.f32.mrf.mxu0
        %v539 = vadd.f32 0.0, %v538
        %v540 = vpop.f32.mrf.mxu0
        %541 = vdwg.mxu0
        %v542 = vmul.f32 %v539, 0.17677669
        %v543 = vcombine.high %v461, %v461
        %v545 = vunpack.c.l.s4 1966171168
        %v546 = vunpack.c.0.s8 %v545
        %v547 = vlaneseq
        %v548 = vshrl.u32 %v547, 7
        %v549 = vsub.s32 %v546, %v548
        %v550 = vrot.slane %v461, %v549
        %v552 = vunpack.c.l.s4 1966171168
        %v553 = vunpack.c.0.s8 %v552
        %v554 = vlaneseq
        %v555 = vshrl.u32 %v554, 7
        %v556 = vsub.s32 %v553, %v555
        %v557 = vrot.slane %v543, %v556
        %v558 = vcombine.high %v550, %v550
        %v559 = vcombine.high %v557, %v557
        %v561 = vunpack.c.l.s4 1966171168
        %v562 = vunpack.c.0.s8 %v561
        %v563 = vlaneseq
        %v564 = vshrl.u32 %v563, 7
        %v565 = vsub.s32 %v562, %v564
        %v566 = vrot.slane %v550, %v565
        %v568 = vunpack.c.l.s4 1966171168
        %v569 = vunpack.c.0.s8 %v568
        %v570 = vlaneseq
        %v571 = vshrl.u32 %v570, 7
        %v572 = vsub.s32 %v569, %v571
        %v573 = vrot.slane %v557, %v572
        %v575 = vunpack.c.l.s4 1966171168
        %v576 = vunpack.c.0.s8 %v575
        %v577 = vlaneseq
        %v578 = vshrl.u32 %v577, 7
        %v579 = vsub.s32 %v576, %v578
        %v580 = vrot.slane %v558, %v579
        %v582 = vunpack.c.l.s4 1966171168
        %v583 = vunpack.c.0.s8 %v582
        %v584 = vlaneseq
        %v585 = vshrl.u32 %v584, 7
        %v586 = vsub.s32 %v583, %v585
        %v587 = vrot.slane %v559, %v586
        %v588 = vcombine.high %v566, %v566
        %v589 = vcombine.high %v573, %v573
        %v590 = vcombine.high %v580, %v580
        %v591 = vcombine.high %v587, %v587
        %v592 = vlaneseq
        %v593 = vshrl.u32 %v592, 7
        %v594 = vsub.s32 0, %v593
        %v595 = vrot.slane %v566, %v594
        %v596 = vlaneseq
        %v597 = vshrl.u32 %v596, 7
        %v598 = vsub.s32 0, %v597
        %v599 = vrot.slane %v580, %v598
        %v600 = vlaneseq
        %v601 = vshrl.u32 %v600, 7
        %v602 = vsub.s32 0, %v601
        %v603 = vrot.slane %v588, %v602
        %v604 = vlaneseq
        %v605 = vshrl.u32 %v604, 7
        %v606 = vsub.s32 0, %v605
        %v607 = vrot.slane %v590, %v606
        %v608 = vlaneseq
        %v609 = vshrl.u32 %v608, 7
        %v610 = vsub.s32 0, %v609
        %v611 = vrot.slane %v573, %v610
        %v612 = vlaneseq
        %v613 = vshrl.u32 %v612, 7
        %v614 = vsub.s32 0, %v613
        %v615 = vrot.slane %v587, %v614
        %v616 = vlaneseq
        %v617 = vshrl.u32 %v616, 7
        %v618 = vsub.s32 0, %v617
        %v619 = vrot.slane %v589, %v618
        %v620 = vlaneseq
        %v621 = vshrl.u32 %v620, 7
        %v622 = vsub.s32 0, %v621
        %v623 = vrot.slane %v591, %v622
        %v632 = vmul.f32 %v595, %v453
        %v633 = vmul.f32 %v599, %v454
        %v634 = vmul.f32 %v603, %v455
        %v635 = vmul.f32 %v607, %v456
        %v636 = vmul.f32 %v611, %v457
        %v637 = vmul.f32 %v615, %v458
        %v638 = vmul.f32 %v619, %v459
        %v639 = vmul.f32 %v623, %v460
        %v640 = vsel %vm465, %v632, 0.0
        %641 = vadd.xlane.f32.xlu0 %v640
        %v642 = vpop.xlane.xlu0 %641
        %v643 = vsel %vm465, %v633, 0.0
        %644 = vadd.xlane.f32.xlu0 %v643
        %v645 = vpop.xlane.xlu0 %644
        %v646 = vsel %vm465, %v634, 0.0
        %647 = vadd.xlane.f32.xlu0 %v646
        %v648 = vpop.xlane.xlu0 %647
        %v649 = vsel %vm465, %v635, 0.0
        %650 = vadd.xlane.f32.xlu0 %v649
        %v651 = vpop.xlane.xlu0 %650
        %v652 = vsel %vm465, %v636, 0.0
        %653 = vadd.xlane.f32.xlu0 %v652
        %v654 = vpop.xlane.xlu0 %653
        %v655 = vsel %vm465, %v637, 0.0
        %656 = vadd.xlane.f32.xlu0 %v655
        %v657 = vpop.xlane.xlu0 %656
        %v658 = vsel %vm465, %v638, 0.0
        %659 = vadd.xlane.f32.xlu0 %v658
        %v660 = vpop.xlane.xlu0 %659
        %v661 = vsel %vm465, %v639, 0.0
        %662 = vadd.xlane.f32.xlu0 %v661
        %v663 = vpop.xlane.xlu0 %662
        %v672 = vlaneseq
        %v673 = vand.u32 %v672, 127
        %v674 = vlaneseq
        %v675 = vshrl.u32 %v674, 7
        %v676 = vsub.s32 %v673, %v675
        %v677 = vrot.slane %v642, %v676
        %v678 = vlaneseq
        %v679 = vshrl.u32 %v678, 7
        %v680 = vsub.s32 %v673, %v679
        %v681 = vrot.slane %v645, %v680
        %v682 = vlaneseq
        %v683 = vshrl.u32 %v682, 7
        %v684 = vsub.s32 %v673, %v683
        %v685 = vrot.slane %v648, %v684
        %v686 = vlaneseq
        %v687 = vshrl.u32 %v686, 7
        %v688 = vsub.s32 %v673, %v687
        %v689 = vrot.slane %v651, %v688
        %v690 = vlaneseq
        %v691 = vshrl.u32 %v690, 7
        %v692 = vsub.s32 %v673, %v691
        %v693 = vrot.slane %v654, %v692
        %v694 = vlaneseq
        %v695 = vshrl.u32 %v694, 7
        %v696 = vsub.s32 %v673, %v695
        %v697 = vrot.slane %v657, %v696
        %v698 = vlaneseq
        %v699 = vshrl.u32 %v698, 7
        %v700 = vsub.s32 %v673, %v699
        %v701 = vrot.slane %v660, %v700
        %v702 = vlaneseq
        %v703 = vshrl.u32 %v702, 7
        %v704 = vsub.s32 %v673, %v703
        %v705 = vrot.slane %v663, %v704
        %vm706 = vcmask 1041409
        %v707 = vsel %vm706, %v681, %v677
        %vm708 = vcmask 1042434
        %v709 = vsel %vm708, %v685, %v707
        %vm710 = vcmask 1043459
        %v711 = vsel %vm710, %v689, %v709
        %vm712 = vcmask 1044484
        %v713 = vsel %vm712, %v693, %v711
        %vm714 = vcmask 1045509
        %v715 = vsel %vm714, %v697, %v713
        %vm716 = vcmask 1046534
        %v717 = vsel %vm716, %v701, %v715
        %vm718 = vcmask 1047559
        %v719 = vsel %vm718, %v705, %v717
        %v721 = vadd.f32 %v542, %v719
        %v722 = vadd.f32 %v721, %v464
        %v723 = vld [vmem:[#allocation2] sm:$0xff]
        %vm724 = vcmask 64512
        %v725 = vsel %vm724, %v722, -inf
        %726 = vmax.xlane.f32.xlu0 %v725
        %v727 = vpop.xlane.xlu0 %726
        %v728 = vmax.f32 %v723, %v727
        %v729 = vsub.f32 %v723, %v728
        %v730 = vmul.f32 %v729, 1.442695
        %v731 = vpow.pop %v730
        %733 = vset.pattern.permute.xlu0 0
        %734 = vperm.xlu0 %733, %v728
        %v735 = vpop.permute.xlu0 %734
        %v737 = vsub.f32 %v722, %v735
        %v738 = vmul.f32 %v737, 1.442695
        %v739 = vpow.pop %v738
        %v740 = vld [vmem:[#allocation3] sm:$0xff]
        %v741 = vmul.f32 %v731, %v740
        %v742 = vsel %vm724, %v739, 0.0
        %743 = vadd.xlane.f32.xlu0 %v742
        %v744 = vpop.xlane.xlu0 %743
        %v745 = vadd.f32 %v741, %v744
        %vm746 = vcmask 7168
        %747 = vst.msk [vmem:[#allocation3] sm:$0xff] %vm746, %v745
        %v749 = vsel %vm724, %v739, 0
        %751 = vmatprep.subr.mxu0 0.0
        %752 = vmatpush1.msra.mxu0 0.0
        %753 = vmatprep.subr.mxu0 0.0
        %754 = vmatpush1.msra.mxu0 0.0
        %755 = vmatprep.subr.mxu0 0.0
        %756 = vmatpush1.msra.mxu0 0.0
        %757 = vmatprep.subr.mxu0 0.0
        %758 = vmatpush1.msra.mxu0 0.0
        %759 = vmatprep.subr.mxu0 0.0
        %760 = vmatpush1.msra.mxu0 0.0
        %761 = vmatprep.subr.mxu0 0.0
        %762 = vmatpush1.msra.mxu0 0.0
        %763 = vmatprep.subr.mxu0 0.0
        %764 = vmatpush1.msra.mxu0 0.0
        %765 = vmatprep.subr.mxu0 0.0
        %766 = vmatpush1.msra.mxu0 0.0
        %767 = vmatprep.subr.mxu0 0.0
        %768 = vmatpush1.msra.mxu0 0.0
        %769 = vmatprep.subr.mxu0 0.0
        %770 = vmatpush1.msra.mxu0 0.0
        %771 = vmatprep.subr.mxu0 0.0
        %772 = vmatpush1.msra.mxu0 0.0
        %773 = vmatprep.subr.mxu0 0.0
        %774 = vmatpush1.msra.mxu0 0.0
        %775 = vmatprep.subr.mxu0 0.0
        %776 = vmatpush1.msra.mxu0 0.0
        %777 = vmatprep.subr.mxu0 0.0
        %778 = vmatpush1.msra.mxu0 0.0
        %779 = vmatprep.subr.mxu0 0.0
        %780 = vmatpush1.msra.mxu0 0.0
        %781 = vmatprep.subr.mxu0 0.0
        %782 = vmatpush1.msra.mxu0 %v463
        %783 = vmatprep.subr.mxu0 0.0
        %784 = vmatpush2.msra.mxu0 0.0
        %785 = vmatprep.subr.mxu0 0.0
        %786 = vmatpush2.msra.mxu0 0.0
        %787 = vmatprep.subr.mxu0 0.0
        %788 = vmatpush2.msra.mxu0 0.0
        %789 = vmatprep.subr.mxu0 0.0
        %790 = vmatpush2.msra.mxu0 0.0
        %791 = vmatprep.subr.mxu0 0.0
        %792 = vmatpush2.msra.mxu0 0.0
        %793 = vmatprep.subr.mxu0 0.0
        %794 = vmatpush2.msra.mxu0 0.0
        %795 = vmatprep.subr.mxu0 0.0
        %796 = vmatpush2.msra.mxu0 0.0
        %797 = vmatprep.subr.mxu0 0.0
        %798 = vmatpush2.msra.mxu0 0.0
        %799 = vmatprep.subr.mxu0 0.0
        %800 = vmatpush2.msra.mxu0 0.0
        %801 = vmatprep.subr.mxu0 0.0
        %802 = vmatpush2.msra.mxu0 0.0
        %803 = vmatprep.subr.mxu0 0.0
        %804 = vmatpush2.msra.mxu0 0.0
        %805 = vmatprep.subr.mxu0 0.0
        %806 = vmatpush2.msra.mxu0 0.0
        %807 = vmatprep.subr.mxu0 0.0
        %808 = vmatpush2.msra.mxu0 0.0
        %809 = vmatprep.subr.mxu0 0.0
        %810 = vmatpush2.msra.mxu0 0.0
        %811 = vmatprep.subr.mxu0 0.0
        %812 = vmatpush2.msra.mxu0 0.0
        %813 = vmatprep.subr.mxu0 0.0
        %814 = vmatpush2.msra.mxu0 0.0
        %815 = vmatprep.mubr.f32.mxu0 0.0
        %816 = vmatmul.mubr.f32.gmra.mxu0 %v749
        %v817 = vpop.f32.mrf.mxu0
        %v818 = vadd.f32 0.0, %v817
        %v819 = vpop.f32.mrf.mxu0
        %820 = vdwg.mxu0
        %v821 = vlaneseq
        %v822 = vshrl.u32 %v821, 7
        %v823 = vsub.s32 0, %v822
        %v824 = vrot.slane %v739, %v823
        %826 = vbcast.lane.b32.xlu0 %v824, 256
        %v827 = vpop.permute.xlu0 %826
        %v828 = vlaneseq
        %v829 = vshrl.u32 %v828, 7
        %v830 = vsub.s32 1, %v829
        %v831 = vrot.slane %v739, %v830
        %833 = vbcast.lane.b32.xlu0 %v831, 256
        %v834 = vpop.permute.xlu0 %833
        %v835 = vlaneseq
        %v836 = vshrl.u32 %v835, 7
        %v837 = vsub.s32 2, %v836
        %v838 = vrot.slane %v739, %v837
        %840 = vbcast.lane.b32.xlu0 %v838, 256
        %v841 = vpop.permute.xlu0 %840
        %v842 = vlaneseq
        %v843 = vshrl.u32 %v842, 7
        %v844 = vsub.s32 3, %v843
        %v845 = vrot.slane %v739, %v844
        %847 = vbcast.lane.b32.xlu0 %v845, 256
        %v848 = vpop.permute.xlu0 %847
        %v849 = vlaneseq
        %v850 = vshrl.u32 %v849, 7
        %v851 = vsub.s32 4, %v850
        %v852 = vrot.slane %v739, %v851
        %854 = vbcast.lane.b32.xlu0 %v852, 256
        %v855 = vpop.permute.xlu0 %854
        %v856 = vlaneseq
        %v857 = vshrl.u32 %v856, 7
        %v858 = vsub.s32 5, %v857
        %v859 = vrot.slane %v739, %v858
        %861 = vbcast.lane.b32.xlu0 %v859, 256
        %v862 = vpop.permute.xlu0 %861
        %v863 = vlaneseq
        %v864 = vshrl.u32 %v863, 7
        %v865 = vsub.s32 6, %v864
        %v866 = vrot.slane %v739, %v865
        %868 = vbcast.lane.b32.xlu0 %v866, 256
        %v869 = vpop.permute.xlu0 %868
        %v870 = vlaneseq
        %v871 = vshrl.u32 %v870, 7
        %v872 = vsub.s32 7, %v871
        %v873 = vrot.slane %v739, %v872
        %875 = vbcast.lane.b32.xlu0 %v873, 256
        %v876 = vpop.permute.xlu0 %875
        %v877 = vmul.f32 %v827, %v453
        %v878 = vmul.f32 %v834, %v454
        %v879 = vmul.f32 %v841, %v455
        %v880 = vmul.f32 %v848, %v456
        %v881 = vmul.f32 %v855, %v457
        %v882 = vmul.f32 %v862, %v458
        %v883 = vmul.f32 %v869, %v459
        %v884 = vmul.f32 %v876, %v460
        %v885 = vsel %vm465, %v877, 0.0
        %v886 = vrot.slane %v885, 4
        %v887 = vadd.f32 %v885, %v886
        %v888 = vrot.slane %v887, 2
        %v889 = vadd.f32 %v887, %v888
        %v890 = vrot.slane %v889, 1
        %v891 = vadd.f32 %v889, %v890
        %v892 = vsel %vm465, %v878, 0.0
        %v893 = vrot.slane %v892, 4
        %v894 = vadd.f32 %v892, %v893
        %v895 = vrot.slane %v894, 2
        %v896 = vadd.f32 %v894, %v895
        %v897 = vrot.slane %v896, 1
        %v898 = vadd.f32 %v896, %v897
        %v899 = vsel %vm465, %v879, 0.0
        %v900 = vrot.slane %v899, 4
        %v901 = vadd.f32 %v899, %v900
        %v902 = vrot.slane %v901, 2
        %v903 = vadd.f32 %v901, %v902
        %v904 = vrot.slane %v903, 1
        %v905 = vadd.f32 %v903, %v904
        %v906 = vsel %vm465, %v880, 0.0
        %v907 = vrot.slane %v906, 4
        %v908 = vadd.f32 %v906, %v907
        %v909 = vrot.slane %v908, 2
        %v910 = vadd.f32 %v908, %v909
        %v911 = vrot.slane %v910, 1
        %v912 = vadd.f32 %v910, %v911
        %v913 = vsel %vm465, %v881, 0.0
        %v914 = vrot.slane %v913, 4
        %v915 = vadd.f32 %v913, %v914
        %v916 = vrot.slane %v915, 2
        %v917 = vadd.f32 %v915, %v916
        %v918 = vrot.slane %v917, 1
        %v919 = vadd.f32 %v917, %v918
        %v920 = vsel %vm465, %v882, 0.0
        %v921 = vrot.slane %v920, 4
        %v922 = vadd.f32 %v920, %v921
        %v923 = vrot.slane %v922, 2
        %v924 = vadd.f32 %v922, %v923
        %v925 = vrot.slane %v924, 1
        %v926 = vadd.f32 %v924, %v925
        %v927 = vsel %vm465, %v883, 0.0
        %v928 = vrot.slane %v927, 4
        %v929 = vadd.f32 %v927, %v928
        %v930 = vrot.slane %v929, 2
        %v931 = vadd.f32 %v929, %v930
        %v932 = vrot.slane %v931, 1
        %v933 = vadd.f32 %v931, %v932
        %v934 = vsel %vm465, %v884, 0.0
        %v935 = vrot.slane %v934, 4
        %v936 = vadd.f32 %v934, %v935
        %v937 = vrot.slane %v936, 2
        %v938 = vadd.f32 %v936, %v937
        %v939 = vrot.slane %v938, 1
        %v940 = vadd.f32 %v938, %v939
        %v941 = vld [vmem:[#allocation4] sm:$0xff]
        %943 = vset.pattern.permute.xlu0 0
        %944 = vperm.xlu0 %943, %v731
        %v945 = vpop.permute.xlu0 %944
        %v947 = vmul.f32 %v945, %v941
        %v948 = vadd.f32 %v947, %v818
        %v957 = vsel %vm706, %v898, %v891
        %v958 = vsel %vm708, %v905, %v957
        %v959 = vsel %vm710, %v912, %v958
        %v960 = vsel %vm712, %v919, %v959
        %v961 = vsel %vm714, %v926, %v960
        %v962 = vsel %vm716, %v933, %v961
        %v963 = vsel %vm718, %v940, %v962
        %v965 = vadd.f32 %v948, %v963
        %966 = vst.msk [vmem:[#allocation4] sm:$0xff] %vm465, %v965
        %967 = vst.msk [vmem:[#allocation2] sm:$0xff] %vm746, %v728
        %s968 = scalar_lea.vmem %s357, 8 [#allocation5]
        %v969 = vld [vmem:[%s968] sm:$0xff]
        %s970 = scalar_lea.vmem %s366, 8 [#allocation8]
        %v971 = vld [vmem:[%s970] sm:$0xff]
        %s972 = scalar_lea.vmem %s375, 8 [#allocation10]
        %v973 = vld [vmem:[%s972] sm:$0xff]
        %s974 = scalar_lea.vmem %s393, 8 [#allocation13]
        %v975 = vld [vmem:[%s974] sm:$0xff]
        %v977 = vsel %vm465, %v969, 0
        %v980 = vsel %vm465, %v971, 0
        %982 = vmatprep.subr.mxu0 0.0
        %983 = vmatpush1.xpose.msra.mxu0 0.0
        %984 = vmatprep.subr.mxu0 0.0
        %985 = vmatpush1.xpose.msra.mxu0 0.0
        %986 = vmatprep.subr.mxu0 0.0
        %987 = vmatpush1.xpose.msra.mxu0 0.0
        %988 = vmatprep.subr.mxu0 0.0
        %989 = vmatpush1.xpose.msra.mxu0 0.0
        %990 = vmatprep.subr.mxu0 0.0
        %991 = vmatpush1.xpose.msra.mxu0 0.0
        %992 = vmatprep.subr.mxu0 0.0
        %993 = vmatpush1.xpose.msra.mxu0 0.0
        %994 = vmatprep.subr.mxu0 0.0
        %995 = vmatpush1.xpose.msra.mxu0 0.0
        %996 = vmatprep.subr.mxu0 0.0
        %997 = vmatpush1.xpose.msra.mxu0 0.0
        %998 = vmatprep.subr.mxu0 0.0
        %999 = vmatpush1.xpose.msra.mxu0 0.0
        %1000 = vmatprep.subr.mxu0 0.0
        %1001 = vmatpush1.xpose.msra.mxu0 0.0
        %1002 = vmatprep.subr.mxu0 0.0
        %1003 = vmatpush1.xpose.msra.mxu0 0.0
        %1004 = vmatprep.subr.mxu0 0.0
        %1005 = vmatpush1.xpose.msra.mxu0 0.0
        %1006 = vmatprep.subr.mxu0 0.0
        %1007 = vmatpush1.xpose.msra.mxu0 0.0
        %1008 = vmatprep.subr.mxu0 0.0
        %1009 = vmatpush1.xpose.msra.mxu0 0.0
        %1010 = vmatprep.subr.mxu0 0.0
        %1011 = vmatpush1.xpose.msra.mxu0 0.0
        %1012 = vmatprep.subr.mxu0 0.0
        %1013 = vmatpush1.xpose.msra.mxu0 %v980
        %1014 = vmatprep.subr.mxu0 0.0
        %1015 = vmatpush2.xpose.msra.mxu0 0.0
        %1016 = vmatprep.subr.mxu0 0.0
        %1017 = vmatpush2.xpose.msra.mxu0 0.0
        %1018 = vmatprep.subr.mxu0 0.0
        %1019 = vmatpush2.xpose.msra.mxu0 0.0
        %1020 = vmatprep.subr.mxu0 0.0
        %1021 = vmatpush2.xpose.msra.mxu0 0.0
        %1022 = vmatprep.subr.mxu0 0.0
        %1023 = vmatpush2.xpose.msra.mxu0 0.0
        %1024 = vmatprep.subr.mxu0 0.0
        %1025 = vmatpush2.xpose.msra.mxu0 0.0
        %1026 = vmatprep.subr.mxu0 0.0
        %1027 = vmatpush2.xpose.msra.mxu0 0.0
        %1028 = vmatprep.subr.mxu0 0.0
        %1029 = vmatpush2.xpose.msra.mxu0 0.0
        %1030 = vmatprep.subr.mxu0 0.0
        %1031 = vmatpush2.xpose.msra.mxu0 0.0
        %1032 = vmatprep.subr.mxu0 0.0
        %1033 = vmatpush2.xpose.msra.mxu0 0.0
        %1034 = vmatprep.subr.mxu0 0.0
        %1035 = vmatpush2.xpose.msra.mxu0 0.0
        %1036 = vmatprep.subr.mxu0 0.0
        %1037 = vmatpush2.xpose.msra.mxu0 0.0
        %1038 = vmatprep.subr.mxu0 0.0
        %1039 = vmatpush2.xpose.msra.mxu0 0.0
        %1040 = vmatprep.subr.mxu0 0.0
        %1041 = vmatpush2.xpose.msra.mxu0 0.0
        %1042 = vmatprep.subr.mxu0 0.0
        %1043 = vmatpush2.xpose.msra.mxu0 0.0
        %1044 = vmatprep.subr.mxu0 0.0
        %1045 = vmatpush2.xpose.msra.mxu0 0.0
        %1046 = vmatprep.mubr.f32.mxu0 0.0
        %1047 = vmatmul.mubr.f32.gmra.mxu0 %v977
        %v1048 = vpop.f32.mrf.mxu0
        %v1049 = vadd.f32 0.0, %v1048
        %v1050 = vpop.f32.mrf.mxu0
        %1051 = vdwg.mxu0
        %v1052 = vmul.f32 %v1049, 0.17677669
        %v1053 = vcombine.high %v969, %v969
        %v1055 = vunpack.c.l.s4 1966171168
        %v1056 = vunpack.c.0.s8 %v1055
        %v1057 = vlaneseq
        %v1058 = vshrl.u32 %v1057, 7
        %v1059 = vsub.s32 %v1056, %v1058
        %v1060 = vrot.slane %v969, %v1059
        %v1062 = vunpack.c.l.s4 1966171168
        %v1063 = vunpack.c.0.s8 %v1062
        %v1064 = vlaneseq
        %v1065 = vshrl.u32 %v1064, 7
        %v1066 = vsub.s32 %v1063, %v1065
        %v1067 = vrot.slane %v1053, %v1066
        %v1068 = vcombine.high %v1060, %v1060
        %v1069 = vcombine.high %v1067, %v1067
        %v1071 = vunpack.c.l.s4 1966171168
        %v1072 = vunpack.c.0.s8 %v1071
        %v1073 = vlaneseq
        %v1074 = vshrl.u32 %v1073, 7
        %v1075 = vsub.s32 %v1072, %v1074
        %v1076 = vrot.slane %v1060, %v1075
        %v1078 = vunpack.c.l.s4 1966171168
        %v1079 = vunpack.c.0.s8 %v1078
        %v1080 = vlaneseq
        %v1081 = vshrl.u32 %v1080, 7
        %v1082 = vsub.s32 %v1079, %v1081
        %v1083 = vrot.slane %v1067, %v1082
        %v1085 = vunpack.c.l.s4 1966171168
        %v1086 = vunpack.c.0.s8 %v1085
        %v1087 = vlaneseq
        %v1088 = vshrl.u32 %v1087, 7
        %v1089 = vsub.s32 %v1086, %v1088
        %v1090 = vrot.slane %v1068, %v1089
        %v1092 = vunpack.c.l.s4 1966171168
        %v1093 = vunpack.c.0.s8 %v1092
        %v1094 = vlaneseq
        %v1095 = vshrl.u32 %v1094, 7
        %v1096 = vsub.s32 %v1093, %v1095
        %v1097 = vrot.slane %v1069, %v1096
        %v1098 = vcombine.high %v1076, %v1076
        %v1099 = vcombine.high %v1083, %v1083
        %v1100 = vcombine.high %v1090, %v1090
        %v1101 = vcombine.high %v1097, %v1097
        %v1102 = vlaneseq
        %v1103 = vshrl.u32 %v1102, 7
        %v1104 = vsub.s32 0, %v1103
        %v1105 = vrot.slane %v1076, %v1104
        %v1106 = vlaneseq
        %v1107 = vshrl.u32 %v1106, 7
        %v1108 = vsub.s32 0, %v1107
        %v1109 = vrot.slane %v1090, %v1108
        %v1110 = vlaneseq
        %v1111 = vshrl.u32 %v1110, 7
        %v1112 = vsub.s32 0, %v1111
        %v1113 = vrot.slane %v1098, %v1112
        %v1114 = vlaneseq
        %v1115 = vshrl.u32 %v1114, 7
        %v1116 = vsub.s32 0, %v1115
        %v1117 = vrot.slane %v1100, %v1116
        %v1118 = vlaneseq
        %v1119 = vshrl.u32 %v1118, 7
        %v1120 = vsub.s32 0, %v1119
        %v1121 = vrot.slane %v1083, %v1120
        %v1122 = vlaneseq
        %v1123 = vshrl.u32 %v1122, 7
        %v1124 = vsub.s32 0, %v1123
        %v1125 = vrot.slane %v1097, %v1124
        %v1126 = vlaneseq
        %v1127 = vshrl.u32 %v1126, 7
        %v1128 = vsub.s32 0, %v1127
        %v1129 = vrot.slane %v1099, %v1128
        %v1130 = vlaneseq
        %v1131 = vshrl.u32 %v1130, 7
        %v1132 = vsub.s32 0, %v1131
        %v1133 = vrot.slane %v1101, %v1132
        %v1142 = vmul.f32 %v1105, %v453
        %v1143 = vmul.f32 %v1109, %v454
        %v1144 = vmul.f32 %v1113, %v455
        %v1145 = vmul.f32 %v1117, %v456
        %v1146 = vmul.f32 %v1121, %v457
        %v1147 = vmul.f32 %v1125, %v458
        %v1148 = vmul.f32 %v1129, %v459
        %v1149 = vmul.f32 %v1133, %v460
        %v1150 = vsel %vm465, %v1142, 0.0
        %1151 = vadd.xlane.f32.xlu0 %v1150
        %v1152 = vpop.xlane.xlu0 %1151
        %v1153 = vsel %vm465, %v1143, 0.0
        %1154 = vadd.xlane.f32.xlu0 %v1153
        %v1155 = vpop.xlane.xlu0 %1154
        %v1156 = vsel %vm465, %v1144, 0.0
        %1157 = vadd.xlane.f32.xlu0 %v1156
        %v1158 = vpop.xlane.xlu0 %1157
        %v1159 = vsel %vm465, %v1145, 0.0
        %1160 = vadd.xlane.f32.xlu0 %v1159
        %v1161 = vpop.xlane.xlu0 %1160
        %v1162 = vsel %vm465, %v1146, 0.0
        %1163 = vadd.xlane.f32.xlu0 %v1162
        %v1164 = vpop.xlane.xlu0 %1163
        %v1165 = vsel %vm465, %v1147, 0.0
        %1166 = vadd.xlane.f32.xlu0 %v1165
        %v1167 = vpop.xlane.xlu0 %1166
        %v1168 = vsel %vm465, %v1148, 0.0
        %1169 = vadd.xlane.f32.xlu0 %v1168
        %v1170 = vpop.xlane.xlu0 %1169
        %v1171 = vsel %vm465, %v1149, 0.0
        %1172 = vadd.xlane.f32.xlu0 %v1171
        %v1173 = vpop.xlane.xlu0 %1172
        %v1182 = vlaneseq
        %v1183 = vshrl.u32 %v1182, 7
        %v1184 = vsub.s32 %v673, %v1183
        %v1185 = vrot.slane %v1152, %v1184
        %v1186 = vlaneseq
        %v1187 = vshrl.u32 %v1186, 7
        %v1188 = vsub.s32 %v673, %v1187
        %v1189 = vrot.slane %v1155, %v1188
        %v1190 = vlaneseq
        %v1191 = vshrl.u32 %v1190, 7
        %v1192 = vsub.s32 %v673, %v1191
        %v1193 = vrot.slane %v1158, %v1192
        %v1194 = vlaneseq
        %v1195 = vshrl.u32 %v1194, 7
        %v1196 = vsub.s32 %v673, %v1195
        %v1197 = vrot.slane %v1161, %v1196
        %v1198 = vlaneseq
        %v1199 = vshrl.u32 %v1198, 7
        %v1200 = vsub.s32 %v673, %v1199
        %v1201 = vrot.slane %v1164, %v1200
        %v1202 = vlaneseq
        %v1203 = vshrl.u32 %v1202, 7
        %v1204 = vsub.s32 %v673, %v1203
        %v1205 = vrot.slane %v1167, %v1204
        %v1206 = vlaneseq
        %v1207 = vshrl.u32 %v1206, 7
        %v1208 = vsub.s32 %v673, %v1207
        %v1209 = vrot.slane %v1170, %v1208
        %v1210 = vlaneseq
        %v1211 = vshrl.u32 %v1210, 7
        %v1212 = vsub.s32 %v673, %v1211
        %v1213 = vrot.slane %v1173, %v1212
        %v1214 = vsel %vm706, %v1189, %v1185
        %v1215 = vsel %vm708, %v1193, %v1214
        %v1216 = vsel %vm710, %v1197, %v1215
        %v1217 = vsel %vm712, %v1201, %v1216
        %v1218 = vsel %vm714, %v1205, %v1217
        %v1219 = vsel %vm716, %v1209, %v1218
        %v1220 = vsel %vm718, %v1213, %v1219
        %v1222 = vadd.f32 %v1052, %v1220
        %v1223 = vadd.f32 %v1222, %v975
        %s1224 = scalar_lea.vmem [#allocation2], 8
        %v1225 = vld [vmem:[%s1224] sm:$0xff]
        %v1226 = vsel %vm724, %v1223, -inf
        %1227 = vmax.xlane.f32.xlu0 %v1226
        %v1228 = vpop.xlane.xlu0 %1227
        %v1229 = vmax.f32 %v1225, %v1228
        %v1230 = vsub.f32 %v1225, %v1229
        %v1231 = vmul.f32 %v1230, 1.442695
        %v1232 = vpow.pop %v1231
        %1234 = vset.pattern.permute.xlu0 0
        %1235 = vperm.xlu0 %1234, %v1229
        %v1236 = vpop.permute.xlu0 %1235
        %v1238 = vsub.f32 %v1223, %v1236
        %v1239 = vmul.f32 %v1238, 1.442695
        %v1240 = vpow.pop %v1239
        %s1241 = scalar_lea.vmem [#allocation3], 8
        %v1242 = vld [vmem:[%s1241] sm:$0xff]
        %v1243 = vmul.f32 %v1232, %v1242
        %v1244 = vsel %vm724, %v1240, 0.0
        %1245 = vadd.xlane.f32.xlu0 %v1244
        %v1246 = vpop.xlane.xlu0 %1245
        %v1247 = vadd.f32 %v1243, %v1246
        %1248 = vst.msk [vmem:[%s1241] sm:$0xff] %vm746, %v1247
        %v1250 = vsel %vm724, %v1240, 0
        %1252 = vmatprep.subr.mxu0 0.0
        %1253 = vmatpush1.msra.mxu0 0.0
        %1254 = vmatprep.subr.mxu0 0.0
        %1255 = vmatpush1.msra.mxu0 0.0
        %1256 = vmatprep.subr.mxu0 0.0
        %1257 = vmatpush1.msra.mxu0 0.0
        %1258 = vmatprep.subr.mxu0 0.0
        %1259 = vmatpush1.msra.mxu0 0.0
        %1260 = vmatprep.subr.mxu0 0.0
        %1261 = vmatpush1.msra.mxu0 0.0
        %1262 = vmatprep.subr.mxu0 0.0
        %1263 = vmatpush1.msra.mxu0 0.0
        %1264 = vmatprep.subr.mxu0 0.0
        %1265 = vmatpush1.msra.mxu0 0.0
        %1266 = vmatprep.subr.mxu0 0.0
        %1267 = vmatpush1.msra.mxu0 0.0
        %1268 = vmatprep.subr.mxu0 0.0
        %1269 = vmatpush1.msra.mxu0 0.0
        %1270 = vmatprep.subr.mxu0 0.0
        %1271 = vmatpush1.msra.mxu0 0.0
        %1272 = vmatprep.subr.mxu0 0.0
        %1273 = vmatpush1.msra.mxu0 0.0
        %1274 = vmatprep.subr.mxu0 0.0
        %1275 = vmatpush1.msra.mxu0 0.0
        %1276 = vmatprep.subr.mxu0 0.0
        %1277 = vmatpush1.msra.mxu0 0.0
        %1278 = vmatprep.subr.mxu0 0.0
        %1279 = vmatpush1.msra.mxu0 0.0
        %1280 = vmatprep.subr.mxu0 0.0
        %1281 = vmatpush1.msra.mxu0 0.0
        %1282 = vmatprep.subr.mxu0 0.0
        %1283 = vmatpush1.msra.mxu0 %v973
        %1284 = vmatprep.subr.mxu0 0.0
        %1285 = vmatpush2.msra.mxu0 0.0
        %1286 = vmatprep.subr.mxu0 0.0
        %1287 = vmatpush2.msra.mxu0 0.0
        %1288 = vmatprep.subr.mxu0 0.0
        %1289 = vmatpush2.msra.mxu0 0.0
        %1290 = vmatprep.subr.mxu0 0.0
        %1291 = vmatpush2.msra.mxu0 0.0
        %1292 = vmatprep.subr.mxu0 0.0
        %1293 = vmatpush2.msra.mxu0 0.0
        %1294 = vmatprep.subr.mxu0 0.0
        %1295 = vmatpush2.msra.mxu0 0.0
        %1296 = vmatprep.subr.mxu0 0.0
        %1297 = vmatpush2.msra.mxu0 0.0
        %1298 = vmatprep.subr.mxu0 0.0
        %1299 = vmatpush2.msra.mxu0 0.0
        %1300 = vmatprep.subr.mxu0 0.0
        %1301 = vmatpush2.msra.mxu0 0.0
        %1302 = vmatprep.subr.mxu0 0.0
        %1303 = vmatpush2.msra.mxu0 0.0
        %1304 = vmatprep.subr.mxu0 0.0
        %1305 = vmatpush2.msra.mxu0 0.0
        %1306 = vmatprep.subr.mxu0 0.0
        %1307 = vmatpush2.msra.mxu0 0.0
        %1308 = vmatprep.subr.mxu0 0.0
        %1309 = vmatpush2.msra.mxu0 0.0
        %1310 = vmatprep.subr.mxu0 0.0
        %1311 = vmatpush2.msra.mxu0 0.0
        %1312 = vmatprep.subr.mxu0 0.0
        %1313 = vmatpush2.msra.mxu0 0.0
        %1314 = vmatprep.subr.mxu0 0.0
        %1315 = vmatpush2.msra.mxu0 0.0
        %1316 = vmatprep.mubr.f32.mxu0 0.0
        %1317 = vmatmul.mubr.f32.gmra.mxu0 %v1250
        %v1318 = vpop.f32.mrf.mxu0
        %v1319 = vadd.f32 0.0, %v1318
        %v1320 = vpop.f32.mrf.mxu0
        %1321 = vdwg.mxu0
        %v1322 = vlaneseq
        %v1323 = vshrl.u32 %v1322, 7
        %v1324 = vsub.s32 0, %v1323
        %v1325 = vrot.slane %v1240, %v1324
        %1327 = vbcast.lane.b32.xlu0 %v1325, 256
        %v1328 = vpop.permute.xlu0 %1327
        %v1329 = vlaneseq
        %v1330 = vshrl.u32 %v1329, 7
        %v1331 = vsub.s32 1, %v1330
        %v1332 = vrot.slane %v1240, %v1331
        %1334 = vbcast.lane.b32.xlu0 %v1332, 256
        %v1335 = vpop.permute.xlu0 %1334
        %v1336 = vlaneseq
        %v1337 = vshrl.u32 %v1336, 7
        %v1338 = vsub.s32 2, %v1337
        %v1339 = vrot.slane %v1240, %v1338
        %1341 = vbcast.lane.b32.xlu0 %v1339, 256
        %v1342 = vpop.permute.xlu0 %1341
        %v1343 = vlaneseq
        %v1344 = vshrl.u32 %v1343, 7
        %v1345 = vsub.s32 3, %v1344
        %v1346 = vrot.slane %v1240, %v1345
        %1348 = vbcast.lane.b32.xlu0 %v1346, 256
        %v1349 = vpop.permute.xlu0 %1348
        %v1350 = vlaneseq
        %v1351 = vshrl.u32 %v1350, 7
        %v1352 = vsub.s32 4, %v1351
        %v1353 = vrot.slane %v1240, %v1352
        %1355 = vbcast.lane.b32.xlu0 %v1353, 256
        %v1356 = vpop.permute.xlu0 %1355
        %v1357 = vlaneseq
        %v1358 = vshrl.u32 %v1357, 7
        %v1359 = vsub.s32 5, %v1358
        %v1360 = vrot.slane %v1240, %v1359
        %1362 = vbcast.lane.b32.xlu0 %v1360, 256
        %v1363 = vpop.permute.xlu0 %1362
        %v1364 = vlaneseq
        %v1365 = vshrl.u32 %v1364, 7
        %v1366 = vsub.s32 6, %v1365
        %v1367 = vrot.slane %v1240, %v1366
        %1369 = vbcast.lane.b32.xlu0 %v1367, 256
        %v1370 = vpop.permute.xlu0 %1369
        %v1371 = vlaneseq
        %v1372 = vshrl.u32 %v1371, 7
        %v1373 = vsub.s32 7, %v1372
        %v1374 = vrot.slane %v1240, %v1373
        %1376 = vbcast.lane.b32.xlu0 %v1374, 256
        %v1377 = vpop.permute.xlu0 %1376
        %v1378 = vmul.f32 %v1328, %v453
        %v1379 = vmul.f32 %v1335, %v454
        %v1380 = vmul.f32 %v1342, %v455
        %v1381 = vmul.f32 %v1349, %v456
        %v1382 = vmul.f32 %v1356, %v457
        %v1383 = vmul.f32 %v1363, %v458
        %v1384 = vmul.f32 %v1370, %v459
        %v1385 = vmul.f32 %v1377, %v460
        %v1386 = vsel %vm465, %v1378, 0.0
        %v1387 = vrot.slane %v1386, 4
        %v1388 = vadd.f32 %v1386, %v1387
        %v1389 = vrot.slane %v1388, 2
        %v1390 = vadd.f32 %v1388, %v1389
        %v1391 = vrot.slane %v1390, 1
        %v1392 = vadd.f32 %v1390, %v1391
        %v1393 = vsel %vm465, %v1379, 0.0
        %v1394 = vrot.slane %v1393, 4
        %v1395 = vadd.f32 %v1393, %v1394
        %v1396 = vrot.slane %v1395, 2
        %v1397 = vadd.f32 %v1395, %v1396
        %v1398 = vrot.slane %v1397, 1
        %v1399 = vadd.f32 %v1397, %v1398
        %v1400 = vsel %vm465, %v1380, 0.0
        %v1401 = vrot.slane %v1400, 4
        %v1402 = vadd.f32 %v1400, %v1401
        %v1403 = vrot.slane %v1402, 2
        %v1404 = vadd.f32 %v1402, %v1403
        %v1405 = vrot.slane %v1404, 1
        %v1406 = vadd.f32 %v1404, %v1405
        %v1407 = vsel %vm465, %v1381, 0.0
        %v1408 = vrot.slane %v1407, 4
        %v1409 = vadd.f32 %v1407, %v1408
        %v1410 = vrot.slane %v1409, 2
        %v1411 = vadd.f32 %v1409, %v1410
        %v1412 = vrot.slane %v1411, 1
        %v1413 = vadd.f32 %v1411, %v1412
        %v1414 = vsel %vm465, %v1382, 0.0
        %v1415 = vrot.slane %v1414, 4
        %v1416 = vadd.f32 %v1414, %v1415
        %v1417 = vrot.slane %v1416, 2
        %v1418 = vadd.f32 %v1416, %v1417
        %v1419 = vrot.slane %v1418, 1
        %v1420 = vadd.f32 %v1418, %v1419
        %v1421 = vsel %vm465, %v1383, 0.0
        %v1422 = vrot.slane %v1421, 4
        %v1423 = vadd.f32 %v1421, %v1422
        %v1424 = vrot.slane %v1423, 2
        %v1425 = vadd.f32 %v1423, %v1424
        %v1426 = vrot.slane %v1425, 1
        %v1427 = vadd.f32 %v1425, %v1426
        %v1428 = vsel %vm465, %v1384, 0.0
        %v1429 = vrot.slane %v1428, 4
        %v1430 = vadd.f32 %v1428, %v1429
        %v1431 = vrot.slane %v1430, 2
        %v1432 = vadd.f32 %v1430, %v1431
        %v1433 = vrot.slane %v1432, 1
        %v1434 = vadd.f32 %v1432, %v1433
        %v1435 = vsel %vm465, %v1385, 0.0
        %v1436 = vrot.slane %v1435, 4
        %v1437 = vadd.f32 %v1435, %v1436
        %v1438 = vrot.slane %v1437, 2
        %v1439 = vadd.f32 %v1437, %v1438
        %v1440 = vrot.slane %v1439, 1
        %v1441 = vadd.f32 %v1439, %v1440
        %s1442 = scalar_lea.vmem [#allocation4], 8
        %v1443 = vld [vmem:[%s1442] sm:$0xff]
        %1445 = vset.pattern.permute.xlu0 0
        %1446 = vperm.xlu0 %1445, %v1232
        %v1447 = vpop.permute.xlu0 %1446
        %v1449 = vmul.f32 %v1447, %v1443
        %v1450 = vadd.f32 %v1449, %v1319
        %v1459 = vsel %vm706, %v1399, %v1392
        %v1460 = vsel %vm708, %v1406, %v1459
        %v1461 = vsel %vm710, %v1413, %v1460
        %v1462 = vsel %vm712, %v1420, %v1461
        %v1463 = vsel %vm714, %v1427, %v1462
        %v1464 = vsel %vm716, %v1434, %v1463
        %v1465 = vsel %vm718, %v1441, %v1464
        %v1467 = vadd.f32 %v1450, %v1465
        %1468 = vst.msk [vmem:[%s1442] sm:$0xff] %vm465, %v1467
        %1469 = vst.msk [vmem:[%s1224] sm:$0xff] %vm746, %v1229
        // Predicated region
        $region65: #{tpu_custom_call.1} parent=39 // pred_check
          %p1470 = pneg %p441
        $region66: #{tpu_custom_call.1} parent=39 // pred_check_branch
          %1472 = sbr.rel (%p1470) target = $region68
        $region67: #{tpu_custom_call.1} parent=39 // pred_region
          %v1473 = vld [vmem:[#allocation3] sm:$0xff]
          %v1474 = vld [vmem:[#allocation3 + $0x8] sm:$0xff]
          %v1475 = vrcp.pop %v1473
          %v1476 = vrcp.pop %v1474
          %v1477 = vld [vmem:[#allocation4] sm:$0xff]
          %v1478 = vld [vmem:[#allocation4 + $0x8] sm:$0xff]
          %1480 = vset.pattern.permute.xlu0 0
          %1481 = vperm.xlu0 %1480, %v1475
          %v1482 = vpop.permute.xlu0 %1481
          %1485 = vset.pattern.permute.xlu0 0
          %1486 = vperm.xlu0 %1485, %v1476
          %v1487 = vpop.permute.xlu0 %1486
          %v1489 = vmul.f32 %v1477, %v1482
          %v1490 = vmul.f32 %v1478, %v1487
          %1491 = vst.msk [vmem:[%s439] sm:$0xff] %vm465, %v1489
          %1492 = vst.msk [vmem:[%s439 + $0x8] sm:$0xff] %vm465, %v1490
        $region68: #{tpu_custom_call.1} parent=39 // pred_fallthru
          _
        %s1493 = sand.u32 %s201, 1
        %s1494 = scalar_lea.sflag [#allocation7], %s1493
        %s1495 = sand.u32 %s201, 1
        %s1496 = smul.addr %s1495, 16
        %s1497 = scalar_lea.vmem [#allocation14], %s1496
        // Predicated region
        $region69: #{tpu_custom_call.1} parent=39 // pred_check
          %p1498 = pneg %p211
        $region70: #{tpu_custom_call.1} parent=39 // pred_check_branch
          %1500 = sbr.rel (%p1498) target = $region72
        $region71: #{tpu_custom_call.1} parent=39 // pred_region
          %s1502 = ssub.s32 256, 256
          %1503 = vsyncadd %s1494, %s1502
          %s1504 = smul.addr %s33, 2
          %s1505 = sadd.s32 %s34, %s1504
          %s1506 = smul.addr %s1505, 128
          %s1507 = scalar_lea.hbm %s5, %s1506
          %s1508 = sshll.u32 %s1497, 4
          %s1509 = int_to_ptr.vmem [resolvable:$true] %s1508
          %1514 = dma.vmem_to_hbm [thread:$0]  %s1509, 256, %s1507, %s1494, 128, 128, 8
        $region72: #{tpu_custom_call.1} parent=39 // pred_fallthru
          _
      $region40: #{tpu_custom_call.1} parent=5 // pred_fallthru
        _
      %p1515 = scmp.le.s32.totalorder 2, %s23
      // Predicated region
      $region73: #{tpu_custom_call.1} parent=5 // pred_check
        %p1516 = pneg %p1515
      $region74: #{tpu_custom_call.1} parent=5 // pred_check_branch
        %1518 = sbr.rel (%p1516) target = $region76
      $region75: #{tpu_custom_call.1} parent=5 // pred_region
        %s1519 = ssub.s32 %s23, 2
        // Predicated region
        $region77: #{tpu_custom_call.1} parent=75 // pred_check
          %p1520 = pneg %p217
        $region78: #{tpu_custom_call.1} parent=75 // pred_check_branch
          %1522 = sbr.rel (%p1520) target = $region80
        $region79: #{tpu_custom_call.1} parent=75 // pred_region
          %s1523 = sand.u32 %s202, 1
          %s1524 = scalar_lea.sflag [#allocation7], %s1523
          %s1525 = sand.u32 %s202, 1
          %s1526 = smul.addr %s1525, 16
          %s1527 = scalar_lea.vmem [#allocation14], %s1526
          %1528 = dma.done %s1524, 256
        $region80: #{tpu_custom_call.1} parent=75 // pred_fallthru
          _
      $region76: #{tpu_custom_call.1} parent=5 // pred_fallthru
        _
    $region6: #{tpu_custom_call.1} parent=1 // loop_footer
      %s27 = sadd.s32 1, %s23
    $region7: #{tpu_custom_call.1} parent=1 // loop_footer_branch
      %22 = sbr.rel target = $region3
    $region8: #{tpu_custom_call.1} parent=1 // loop_exit
      _
    %1529 = vsyncpa [#allocation6], 1
    %s1530 = scalar_lea.sflag [#allocation6], 1
    %1531 = vsyncpa %s1530, 1
    %1532 = vsyncpa [#allocation9], 1
    %s1533 = scalar_lea.sflag [#allocation9], 1
    %1534 = vsyncpa %s1533, 1
    %1535 = vsyncpa [#allocation12], 1
    %s1536 = scalar_lea.sflag [#allocation12], 1
    %1537 = vsyncpa %s1536, 1
    %1538 = vsyncpa [#allocation7], 1
    %s1539 = scalar_lea.sflag [#allocation7], 1
    %1540 = vsyncpa %s1539, 1

</llo_original>
